<compile_context>
chip_gen: v7x
topology: tpu7x:2x2x1
jax: 0.10.0
libtpu: 0.0.40
codegen_flags: <defaults>
</compile_context>

<pallas_src>
import math

import jax
import jax.numpy as jnp
from jax.experimental import pallas as pl
from jax.experimental.pallas import tpu as pltpu

LRELU_GAIN = math.sqrt(2.0)


# ----------------------------------------------------------------------------
# Small in-kernel helpers
# ----------------------------------------------------------------------------
def _mm(a, b):
    """MXU matmul: bf16 operands, f32 accumulation."""
    return jnp.dot(a.astype(jnp.bfloat16), b.astype(jnp.bfloat16),
                   preferred_element_type=jnp.float32)


def _lrelu(x):
    return jnp.where(x >= 0.0, x, 0.2 * x) * LRELU_GAIN


# ----------------------------------------------------------------------------
# Kernel 1: fused layout decoder (per-pixel NeRF MLP + fused heads)
# Layout: (C, HW) per sample, HW = 256 on lanes.
# ----------------------------------------------------------------------------
def _mapping_kernel(pos_ref, noise_ref, wproj_ref,
                    w0p_ref, w0n_ref, w1_ref, b1_ref, wh_ref, bh_ref,
                    feat_out_ref, rgb_out_ref):
    pos = pos_ref[...]          # (4, HW)   shared positional encoding
    noise = noise_ref[0]        # (1, HW)   per-sample layout noise
    wproj = wproj_ref[0]        # (hidden, 1)  w-branch of nerf0 (+ bias)

    # nerf0 split by input group == concat([pos, noise, w]) @ W0 + b0
    h = _mm(w0p_ref[...], pos) + w0n_ref[...] * noise + wproj
    h = _lrelu(h)                                           # (hidden, HW)

    feat = _mm(w1_ref[...], h) + b1_ref[...]                # (C_feat, HW)

    # fused rgb|depth|acc heads; sigmoid only on the last (acc) row
    out5 = _mm(wh_ref[...], feat) + bh_ref[...]             # (5, HW)
    row = jax.lax.broadcasted_iota(jnp.int32, out5.shape, 0)
    out5 = jnp.where(row == out5.shape[0] - 1, jax.nn.sigmoid(out5), out5)

    feat_out_ref[0] = feat.astype(feat_out_ref.dtype)
    rgb_out_ref[0] = out5.astype(rgb_out_ref.dtype)


def fused_layout_decoder(params, cfg, w, noise_input):
    """Runs the per-pixel decoder + heads in one pallas_call.

    Returns feat_t (B, feat_channels, HW) and to_rgb_t (B, 5, HW) where the
    5 channels are rgb | depth | sigmoid(acc), both in channel-major layout.
    """
    B = w.shape[0]
    S = cfg.nerf_out_res
    HW = S * S
    C = cfg.feat_channels
    rgbc = cfg.img_channels + cfg.num_additional_feature_channels    # 5

    # positional encoding of the low-res grid (same as before, transposed)
    lin = jnp.linspace(-1.0, 1.0, S, dtype=jnp.float32)
    gy, gx = jnp.meshgrid(lin, lin, indexing="ij")
    pos = jnp.stack(
        [gx, gy, jnp.sin(math.pi * gx), jnp.cos(math.pi * gy)],
        axis=-1).reshape(HW, 4)
    pos_t = pos.T                                           # (4, HW)

    noise_t = noise_input.reshape(B, 1, HW)                 # (B, 1, HW)

    # split nerf0 weight by input group; the w-branch is per-sample constant,
    # so it (and the bias) are folded into a tiny XLA matmul outside.
    n0w, n0b = params["nerf0"]                              # (37, hidden)
    hidden = n0w.shape[1]
    w0p_t = n0w[0:4].T                                      # (hidden, 4)
    w0n_t = n0w[4:5].T                                      # (hidden, 1)
    wproj = (w @ n0w[5:] + n0b).reshape(B, hidden, 1)       # (B, hidden, 1)

    n1w, n1b = params["nerf1"]
    w1_t = n1w.T                                            # (C, hidden)
    b1 = n1b.reshape(C, 1)

    # fused heads: rgb(3) | depth(1) | acc(1)
    wh_t = jnp.concatenate(
        [params["rgb_head"][0], params["depth_head"][0],
         params["acc_head"][0]], axis=1).T                  # (5, C)
    bh = jnp.concatenate(
        [params["rgb_head"][1], params["depth_head"][1],
         params["acc_head"][1]]).reshape(rgbc, 1)

    feat_t, rgb_t = pl.pallas_call(
        _mapping_kernel,
        out_shape=(jax.ShapeDtypeStruct((B, C, HW), jnp.float32),
                   jax.ShapeDtypeStruct((B, rgbc, HW), jnp.float32)),
        grid=(B,),
        in_specs=[
            pl.BlockSpec((4, HW), lambda i: (0, 0)),
            pl.BlockSpec((1, 1, HW), lambda i: (i, 0, 0)),
            pl.BlockSpec((1, hidden, 1), lambda i: (i, 0, 0)),
            pl.BlockSpec((hidden, 4), lambda i: (0, 0)),
            pl.BlockSpec((hidden, 1), lambda i: (0, 0)),
            pl.BlockSpec((C, hidden), lambda i: (0, 0)),
            pl.BlockSpec((C, 1), lambda i: (0, 0)),
            pl.BlockSpec((rgbc, C), lambda i: (0, 0)),
            pl.BlockSpec((rgbc, 1), lambda i: (0, 0)),
        ],
        out_specs=(
            pl.BlockSpec((1, C, HW), lambda i: (i, 0, 0)),
            pl.BlockSpec((1, rgbc, HW), lambda i: (i, 0, 0)),
        ),
        compiler_params=pltpu.CompilerParams(
            dimension_semantics=("parallel",)),
    )(pos_t, noise_t, wproj, w0p_t, w0n_t, w1_t, b1, wh_t, bh)
    return feat_t, rgb_t


# ----------------------------------------------------------------------------
# Kernel 2: fused upsampler synthesis (both StyleGAN2-style blocks)
# Layout: (C, HW) per sample; modulation folded into the (Cout, Cin) weight.
# ----------------------------------------------------------------------------
def _synthesis_kernel(feat_ref, rgb_ref, noise_ref,
                      s0_ref, st0_ref, s1_ref, st1_ref,
                      c0w_ref, c0b_ref, t0w_ref, t0b_ref,
                      skw_ref, skb_ref, c1w_ref, c1b_ref,
                      t1w_ref, t1b_ref, ns_ref, out_ref):
    feat = feat_ref[0]          # (cin0, HW)
    rgb = rgb_ref[0]            # (rgbc, HW)
    noise = noise_ref[0]        # (1, HW)

    def modconv(x, w_t, s_row, b_col, demod, act):
        # StyleGAN2 modulated 1x1 conv in transposed layout:
        #   (W^T * s_row) @ x  ==  (x * s_col) @ W, demod per output channel.
        w_mod = w_t * s_row                                 # (Cout, Cin) f32
        y = _mm(w_mod, x)                                   # (Cout, HW)
        if demod:
            d = jax.lax.rsqrt(
                jnp.sum(w_mod * w_mod, axis=1, keepdims=True) + 1e-8)
            y = y * d
        y = y + b_col
        if act:
            y = _lrelu(y)
        return y

    # ---- block 0 (nominally 32x32; computed on the 16x16 source grid) ----
    x = modconv(feat, c0w_ref[...], s0_ref[0], c0b_ref[...], True, True)
    x = x + ns_ref[...] * noise                             # '3dnoise' mode
    y0 = modconv(x, t0w_ref[...], st0_ref[0], t0b_ref[...], False, False)
    skip = _mm(skw_ref[...], rgb) + skb_ref[...]
    img = skip + y0

    # ---- block 1 (nominally 64x64) ----
    x = modconv(x, c1w_ref[...], s1_ref[0], c1b_ref[...], True, True)
    y1 = modconv(x, t1w_ref[...], st1_ref[0], t1b_ref[...], False, False)
    img = img + y1

    out_ref[0] = img.astype(out_ref.dtype)


# ----------------------------------------------------------------------------
# Glue (plain JAX / XLA)
# ----------------------------------------------------------------------------
def pixel_norm(x, eps=1e-8):
    return x * jax.lax.rsqrt(jnp.mean(x * x, axis=-1, keepdims=True) + eps)


def dense_lrelu(x, w, b):
    # tiny (M=B) mapping-MLP layers: launch overhead of a pallas_call would
    # dwarf the nanoseconds of compute, so keep these in XLA.
    y = x @ w + b
    return jnp.where(y >= 0.0, y, 0.2 * y) * LRELU_GAIN


# ----------------------------------------------------------------------------
# Config / parameters
# ----------------------------------------------------------------------------
class TerrainConfig:
    z_dim = 32
    w_dim = 32
    c_dim = 0
    nerf_out_res = 16                    # layout decoder low-res grid
    feat_channels = 16                   # nerf_mlp out_channel == upsampler input_channels
    num_additional_feature_channels = 2  # + depth + acc
    hidden = 32                          # upsampler per-block channels
    input_resolution = 32                # upsampler input resolution
    img_resolution = 64                  # upsampler output resolution
    img_channels = 3


def init_params(key, cfg):
    keys = iter(jax.random.split(key, 64))

    def dense(fan_in, fan_out, bias_init=0.0):
        w = jax.random.normal(next(keys), (fan_in, fan_out),
                              jnp.float32) / math.sqrt(fan_in)
        b = jnp.full((fan_out,), bias_init, jnp.float32)
        return w, b

    cin0 = cfg.feat_channels + cfg.num_additional_feature_channels   # 18
    rgbc = cfg.img_channels + cfg.num_additional_feature_channels    # 5
    nerf_in = 4 + 1 + cfg.w_dim                                      # pos + noise + w

    p = {
        # layout mapping (z -> w)
        "lm0": dense(cfg.z_dim, cfg.w_dim),
        "lm1": dense(cfg.w_dim, cfg.w_dim),
        # per-pixel NeRF-style MLP decoder
        "nerf0": dense(nerf_in, cfg.hidden),
        "nerf1": dense(cfg.hidden, cfg.feat_channels),
        # heads
        "rgb_head": dense(cfg.feat_channels, cfg.img_channels),
        "depth_head": dense(cfg.feat_channels, 1),
        "acc_head": dense(cfg.feat_channels, 1),
        # upsampler mapping (ws[:, 0] -> upsampler w)
        "um0": dense(cfg.w_dim, cfg.w_dim),
        "um1": dense(cfg.w_dim, cfg.w_dim),
        # upsampler synthesis
        "aff_conv0": dense(cfg.w_dim, cin0, bias_init=1.0),
        "conv0": dense(cin0, cfg.hidden),
        "aff_trgb0": dense(cfg.w_dim, cfg.hidden, bias_init=1.0),
        "trgb0": dense(cfg.hidden, cfg.img_channels),
        "skip_proj": dense(rgbc, cfg.img_channels),
        "aff_conv1": dense(cfg.w_dim, cfg.hidden, bias_init=1.0),
        "conv1": dense(cfg.hidden, cfg.hidden),
        "aff_trgb1": dense(cfg.w_dim, cfg.hidden, bias_init=1.0),
        "trgb1": dense(cfg.hidden, cfg.img_channels),
        "noise_strength": jnp.float32(0.1),
    }
    return p


# ----------------------------------------------------------------------------
# ModelTerrain.mapping
# ----------------------------------------------------------------------------
def terrain_mapping(params, cfg, z, c=None, noise_input=None):
    B = z.shape[0]
    S = cfg.nerf_out_res
    ic = cfg.img_channels
    assert noise_input is not None and noise_input.shape == (B, 1, S, S)

    # layout mapping network (XLA; M=B)
    w = pixel_norm(z)
    w = dense_lrelu(w, *params["lm0"])
    w = dense_lrelu(w, *params["lm1"])
    ws_layout = jnp.tile(w[:, None, :], (1, 2, 1))            # (B, num_ws, w_dim)

    # fused per-pixel decoder + heads (single pallas_call)
    feat_t, rgb_t = fused_layout_decoder(params, cfg, w, noise_input)
    # rgb_t channels: rgb(3) | depth(1) | sigmoid(acc)(1)

    to_rgb_input = rgb_t.reshape(B, -1, S, S)                 # NCHW (B, 5, S, S)
    rgb_feature = feat_t.reshape(B, cfg.feat_channels, S, S)  # NCHW (B, 16, S, S)
    fake_depth = to_rgb_input[:, ic:ic + 1]
    fake_acc = to_rgb_input[:, ic + 1:ic + 2]

    # num_additional_feature_channels == 2 -> concat depth and acc
    feature = jnp.concatenate([rgb_feature, fake_depth, fake_acc], axis=1)

    # upsampler mapping on ws[:, 0] (XLA; M=B)
    uw = pixel_norm(ws_layout[:, 0])
    uw = dense_lrelu(uw, *params["um0"])
    uw = dense_lrelu(uw, *params["um1"])
    upsampler_ws = jnp.tile(uw[:, None, :], (1, 4, 1))        # (B, 4, w_dim)

    # TODO(synk): Rt/K come from the pickled layout model's camera sampling
    # (camera_util.get_full_image_parameters); identity placeholders used here.
    Rt = jnp.broadcast_to(jnp.eye(4, dtype=jnp.float32)[None], (B, 4, 4))
    K = jnp.broadcast_to(jnp.eye(3, dtype=jnp.float32)[None], (B, 3, 3))
    extras = dict(z=z, K=K, Rt=Rt, layout=rgb_feature, depth=fake_depth,
                  acc=fake_acc, rgb_feature=rgb_feature,
                  layout_noise=noise_input)
    return upsampler_ws, feature, to_rgb_input, extras


# ----------------------------------------------------------------------------
# ModelTerrain.synthesis
# ----------------------------------------------------------------------------
def terrain_synthesis(params, cfg, upsampler_ws, feature, to_rgb_input, extras):
    B = feature.shape[0]
    S = cfg.nerf_out_res
    HW = S * S
    cin0 = feature.shape[1]                 # 18
    rgbc = to_rgb_input.shape[1]            # 5
    hid = cfg.hidden
    ic = cfg.img_channels

    # channel-major flattening (pure reshape of NCHW)
    feat_t = feature.reshape(B, cin0, HW)
    rgb_t = to_rgb_input.reshape(B, rgbc, HW)
    noise_t = extras["layout_noise"].reshape(B, 1, HW)        # '3dnoise' mode

    # all four style affines fused into ONE XLA matmul (the upsampler ws rows
    # are identical broadcasts of the same w, as produced by the mapping).
    affs = [params["aff_conv0"], params["aff_trgb0"],
            params["aff_conv1"], params["aff_trgb1"]]
    a_cat = jnp.concatenate([a[0] for a in affs], axis=1)     # (w_dim, 114)
    b_cat = jnp.concatenate([a[1] for a in affs])             # (114,)
    styles = upsampler_ws[:, 0] @ a_cat + b_cat               # (B, 114)
    o0, o1, o2 = cin0, cin0 + hid, cin0 + 2 * hid
    s0 = styles[:, :o0].reshape(B, 1, cin0)
    st0 = styles[:, o0:o1].reshape(B, 1, hid)
    s1 = styles[:, o1:o2].reshape(B, 1, hid)
    st1 = styles[:, o2:].reshape(B, 1, hid)

    # transposed (Cout, Cin) weights / column biases for the fused kernel
    c0w = params["conv0"][0].T
    c0b = params["conv0"][1].reshape(hid, 1)
    t0w = params["trgb0"][0].T
    t0b = params["trgb0"][1].reshape(ic, 1)
    skw = params["skip_proj"][0].T
    skb = params["skip_proj"][1].reshape(ic, 1)
    c1w = params["conv1"][0].T
    c1b = params["conv1"][1].reshape(hid, 1)
    t1w = params["trgb1"][0].T
    t1b = params["trgb1"][1].reshape(ic, 1)
    ns = jnp.asarray(params["noise_strength"], jnp.float32).reshape(1, 1)

    # Note: at these sizes a whole per-sample image fits trivially in VMEM;
    # if img_resolution grows, tile HW (multiples of 8x128) in the grid.
    img_low = pl.pallas_call(
        _synthesis_kernel,
        out_shape=jax.ShapeDtypeStruct((B, ic, HW), jnp.float32),
        grid=(B,),
        in_specs=[
            pl.BlockSpec((1, cin0, HW), lambda i: (i, 0, 0)),
            pl.BlockSpec((1, rgbc, HW), lambda i: (i, 0, 0)),
            pl.BlockSpec((1, 1, HW), lambda i: (i, 0, 0)),
            pl.BlockSpec((1, 1, cin0), lambda i: (i, 0, 0)),
            pl.BlockSpec((1, 1, hid), lambda i: (i, 0, 0)),
            pl.BlockSpec((1, 1, hid), lambda i: (i, 0, 0)),
            pl.BlockSpec((1, 1, hid), lambda i: (i, 0, 0)),
            pl.BlockSpec((hid, cin0), lambda i: (0, 0)),
            pl.BlockSpec((hid, 1), lambda i: (0, 0)),
            pl.BlockSpec((ic, hid), lambda i: (0, 0)),
            pl.BlockSpec((ic, 1), lambda i: (0, 0)),
            pl.BlockSpec((ic, rgbc), lambda i: (0, 0)),
            pl.BlockSpec((ic, 1), lambda i: (0, 0)),
            pl.BlockSpec((hid, hid), lambda i: (0, 0)),
            pl.BlockSpec((hid, 1), lambda i: (0, 0)),
            pl.BlockSpec((ic, hid), lambda i: (0, 0)),
            pl.BlockSpec((ic, 1), lambda i: (0, 0)),
            pl.BlockSpec((1, 1), lambda i: (0, 0)),
        ],
        out_specs=pl.BlockSpec((1, ic, HW), lambda i: (i, 0, 0)),
        compiler_params=pltpu.CompilerParams(
            dimension_semantics=("parallel",)),
    )(feat_t, rgb_t, noise_t, s0, st0, s1, st1,
      c0w, c0b, t0w, t0b, skw, skb, c1w, c1b, t1w, t1b, ns)

    # Exact final resampling: all convs are 1x1 and all resizes are nearest,
    # so the 16->32->64 pipeline is per-source-pixel; replicate once here.
    # TODO(synk): reference uses antialiased bilinear interpolate() and FIR
    # resample filters; with those, per-resolution compute would be needed.
    up = cfg.img_resolution // S
    img = img_low.reshape(B, ic, S, S)
    img = jnp.repeat(jnp.repeat(img, up, axis=2), up, axis=3)
    return img


# ----------------------------------------------------------------------------
# ModelTerrain.forward
# ----------------------------------------------------------------------------
def model_terrain_forward(params, cfg, z, c=None, noise_input=None):
    upsampler_ws, feature, rgb_thumbnail, extras = terrain_mapping(
        params, cfg, z, c=c, noise_input=noise_input)
    rgb_up = terrain_synthesis(params, cfg, upsampler_ws, feature,
                               rgb_thumbnail, extras)
    return rgb_up, rgb_thumbnail


if __name__ == "__main__":
    cfg = TerrainConfig()
    key = jax.random.PRNGKey(0)
    kp, kz, kn = jax.random.split(key, 3)
    params = init_params(kp, cfg)

    B = 2
    z = jax.random.normal(kz, (B, cfg.z_dim), jnp.float32)
    noise_input = jax.random.normal(
        kn, (B, 1, cfg.nerf_out_res, cfg.nerf_out_res), jnp.float32)

    fwd = jax.jit(lambda z_, n_: model_terrain_forward(
        params, cfg, z_, c=None, noise_input=n_))
    rgb_up, rgb_thumbnail = fwd(z, noise_input)
    jax.block_until_ready(rgb_up)
    jax.block_until_ready(rgb_thumbnail)

    assert rgb_up.shape == (B, cfg.img_channels,
                            cfg.img_resolution, cfg.img_resolution)
    assert rgb_thumbnail.shape == (
        B, cfg.img_channels + cfg.num_additional_feature_channels,
        cfg.nerf_out_res, cfg.nerf_out_res)
    assert rgb_up.dtype == jnp.float32 and rgb_thumbnail.dtype == jnp.float32
    assert bool(jnp.all(jnp.isfinite(rgb_up)))
    assert bool(jnp.all(jnp.isfinite(rgb_thumbnail)))
    print("KERNEL_OK")
</pallas_src>

<mosaic_0001>
module attributes {stable_mosaic.version = 11 : i64} {
  func.func @_mapping_kernel(%arg0: i32, %arg1: memref<4x256xf32, #tpu.memory_space<vmem>>, %arg2: memref<1x1x256xf32, #tpu.memory_space<vmem>>, %arg3: memref<1x32x1xf32, #tpu.memory_space<vmem>>, %arg4: memref<32x4xf32, #tpu.memory_space<vmem>>, %arg5: memref<32x1xf32, #tpu.memory_space<vmem>>, %arg6: memref<16x32xf32, #tpu.memory_space<vmem>>, %arg7: memref<16x1xf32, #tpu.memory_space<vmem>>, %arg8: memref<5x16xf32, #tpu.memory_space<vmem>>, %arg9: memref<5x1xf32, #tpu.memory_space<vmem>>, %arg10: memref<1x16x256xf32, #tpu.memory_space<vmem>>, %arg11: memref<1x5x256xf32, #tpu.memory_space<vmem>>) attributes {dimension_semantics = [#tpu.dimension_semantics<parallel>], iteration_bounds = array<i64: 2>, scalar_prefetch = 0 : i64, scratch_operands = 0 : i64, tpu.core_type = #tpu.core_type<tc>, window_params = [{pipeline_mode = #tpu.pipeline_mode<synchronous>, transform_indices = @transform_0, window_bounds = array<i64: 4, 256>}, {transform_indices = @transform_1, window_bounds = array<i64: 1, 1, 256>}, {transform_indices = @transform_2, window_bounds = array<i64: 1, 32, 1>}, {pipeline_mode = #tpu.pipeline_mode<synchronous>, transform_indices = @transform_3, window_bounds = array<i64: 32, 4>}, {pipeline_mode = #tpu.pipeline_mode<synchronous>, transform_indices = @transform_4, window_bounds = array<i64: 32, 1>}, {pipeline_mode = #tpu.pipeline_mode<synchronous>, transform_indices = @transform_5, window_bounds = array<i64: 16, 32>}, {pipeline_mode = #tpu.pipeline_mode<synchronous>, transform_indices = @transform_6, window_bounds = array<i64: 16, 1>}, {pipeline_mode = #tpu.pipeline_mode<synchronous>, transform_indices = @transform_7, window_bounds = array<i64: 5, 16>}, {pipeline_mode = #tpu.pipeline_mode<synchronous>, transform_indices = @transform_8, window_bounds = array<i64: 5, 1>}, {transform_indices = @transform_9, window_bounds = array<i64: 1, 16, 256>}, {transform_indices = @transform_10, window_bounds = array<i64: 1, 5, 256>}]} {
    %c0 = arith.constant 0 : index
    %c0_0 = arith.constant 0 : index
    %0 = vector.load %arg1[%c0, %c0_0] : memref<4x256xf32, #tpu.memory_space<vmem>>, vector<4x256xf32>
    %c0_1 = arith.constant 0 : index
    %c0_2 = arith.constant 0 : index
    %c0_3 = arith.constant 0 : index
    %1 = vector.load %arg2[%c0_1, %c0_2, %c0_3] : memref<1x1x256xf32, #tpu.memory_space<vmem>>, vector<1x1x256xf32>
    %2 = vector.shape_cast %1 : vector<1x1x256xf32> to vector<1x256xf32>
    %c0_4 = arith.constant 0 : index
    %c0_5 = arith.constant 0 : index
    %c0_6 = arith.constant 0 : index
    %3 = vector.load %arg3[%c0_4, %c0_5, %c0_6] : memref<1x32x1xf32, #tpu.memory_space<vmem>>, vector<1x32x1xf32>
    %4 = vector.shape_cast %3 : vector<1x32x1xf32> to vector<32x1xf32>
    %c0_7 = arith.constant 0 : index
    %c0_8 = arith.constant 0 : index
    %5 = vector.load %arg4[%c0_7, %c0_8] : memref<32x4xf32, #tpu.memory_space<vmem>>, vector<32x4xf32>
    %6 = arith.truncf %5 : vector<32x4xf32> to vector<32x4xbf16>
    %7 = arith.truncf %0 : vector<4x256xf32> to vector<4x256xbf16>
    %cst = arith.constant dense<0.000000e+00> : vector<32x256xf32>
    %8 = tpu.matmul %6, %7, %cst {dimension_numbers = #tpu.dot_dimension_numbers<[1], [0], [0], [1], [0, 0, 1, 1], [], []>} : vector<32x4xbf16>, vector<4x256xbf16>, vector<32x256xf32> -> vector<32x256xf32>
    %c0_9 = arith.constant 0 : index
    %c0_10 = arith.constant 0 : index
    %9 = vector.load %arg5[%c0_9, %c0_10] : memref<32x1xf32, #tpu.memory_space<vmem>>, vector<32x1xf32>
    %10 = vector.broadcast %9 : vector<32x1xf32> to vector<32x256xf32>
    %11 = vector.broadcast %2 : vector<1x256xf32> to vector<32x256xf32>
    %12 = arith.mulf %10, %11 : vector<32x256xf32>
    %13 = arith.addf %8, %12 : vector<32x256xf32>
    %14 = vector.broadcast %4 : vector<32x1xf32> to vector<32x256xf32>
    %15 = arith.addf %13, %14 : vector<32x256xf32>
    %cst_11 = arith.constant 0.000000e+00 : f32
    %16 = vector.broadcast %cst_11 : f32 to vector<32x256xf32>
    %17 = arith.cmpf oge, %15, %16 : vector<32x256xf32>
    %cst_12 = arith.constant 2.000000e-01 : f32
    %18 = vector.broadcast %cst_12 : f32 to vector<32x256xf32>
    %19 = arith.mulf %18, %15 : vector<32x256xf32>
    %20 = arith.select %17, %15, %19 : vector<32x256xi1>, vector<32x256xf32>
    %cst_13 = arith.constant 1.41421354 : f32
    %21 = vector.broadcast %cst_13 : f32 to vector<32x256xf32>
    %22 = arith.mulf %20, %21 : vector<32x256xf32>
    %c0_14 = arith.constant 0 : index
    %c0_15 = arith.constant 0 : index
    %23 = vector.load %arg6[%c0_14, %c0_15] : memref<16x32xf32, #tpu.memory_space<vmem>>, vector<16x32xf32>
    %24 = arith.truncf %23 : vector<16x32xf32> to vector<16x32xbf16>
    %25 = arith.truncf %22 : vector<32x256xf32> to vector<32x256xbf16>
    %cst_16 = arith.constant dense<0.000000e+00> : vector<16x256xf32>
    %26 = tpu.matmul %24, %25, %cst_16 {dimension_numbers = #tpu.dot_dimension_numbers<[1], [0], [0], [1], [0, 0, 1, 1], [], []>} : vector<16x32xbf16>, vector<32x256xbf16>, vector<16x256xf32> -> vector<16x256xf32>
    %c0_17 = arith.constant 0 : index
    %c0_18 = arith.constant 0 : index
    %27 = vector.load %arg7[%c0_17, %c0_18] : memref<16x1xf32, #tpu.memory_space<vmem>>, vector<16x1xf32>
    %28 = vector.broadcast %27 : vector<16x1xf32> to vector<16x256xf32>
    %29 = arith.addf %26, %28 : vector<16x256xf32>
    %c0_19 = arith.constant 0 : index
    %c0_20 = arith.constant 0 : index
    %30 = vector.load %arg8[%c0_19, %c0_20] : memref<5x16xf32, #tpu.memory_space<vmem>>, vector<5x16xf32>
    %31 = arith.truncf %30 : vector<5x16xf32> to vector<5x16xbf16>
    %32 = arith.truncf %29 : vector<16x256xf32> to vector<16x256xbf16>
    %cst_21 = arith.constant dense<0.000000e+00> : vector<5x256xf32>
    %33 = tpu.matmul %31, %32, %cst_21 {dimension_numbers = #tpu.dot_dimension_numbers<[1], [0], [0], [1], [0, 0, 1, 1], [], []>} : vector<5x16xbf16>, vector<16x256xbf16>, vector<5x256xf32> -> vector<5x256xf32>
    %c0_22 = arith.constant 0 : index
    %c0_23 = arith.constant 0 : index
    %34 = vector.load %arg9[%c0_22, %c0_23] : memref<5x1xf32, #tpu.memory_space<vmem>>, vector<5x1xf32>
    %35 = vector.broadcast %34 : vector<5x1xf32> to vector<5x256xf32>
    %36 = arith.addf %33, %35 : vector<5x256xf32>
    %37 = tpu.iota {dimensions = array<i32: 0>} : vector<5x256xi32>
    %c4_i32 = arith.constant 4 : i32
    %38 = vector.broadcast %c4_i32 : i32 to vector<5x256xi32>
    %39 = arith.cmpi eq, %37, %38 : vector<5x256xi32>
    %40 = arith.negf %36 : vector<5x256xf32>
    %41 = math.exp %40 : vector<5x256xf32>
    %cst_24 = arith.constant 1.000000e+00 : f32
    %42 = vector.broadcast %cst_24 : f32 to vector<5x256xf32>
    %43 = arith.addf %42, %41 : vector<5x256xf32>
    %44 = arith.divf %42, %43 : vector<5x256xf32>
    %45 = arith.select %39, %44, %36 : vector<5x256xi1>, vector<5x256xf32>
    %c0_25 = arith.constant 0 : index
    %c0_26 = arith.constant 0 : index
    %c0_27 = arith.constant 0 : index
    %46 = vector.load %arg10[%c0_25, %c0_26, %c0_27] : memref<1x16x256xf32, #tpu.memory_space<vmem>>, vector<1x16x256xf32>
    %47 = vector.shape_cast %46 : vector<1x16x256xf32> to vector<16x256xf32>
    %48 = vector.shape_cast %29 : vector<16x256xf32> to vector<1x16x256xf32>
    tpu.vector_store %arg10[%c0_25, %c0_26, %c0_27], %48 {strides = array<i32>} : memref<1x16x256xf32, #tpu.memory_space<vmem>>, vector<1x16x256xf32>,
    %c0_28 = arith.constant 0 : index
    %c0_29 = arith.constant 0 : index
    %c0_30 = arith.constant 0 : index
    %49 = vector.load %arg11[%c0_28, %c0_29, %c0_30] : memref<1x5x256xf32, #tpu.memory_space<vmem>>, vector<1x5x256xf32>
    %50 = vector.shape_cast %49 : vector<1x5x256xf32> to vector<5x256xf32>
    %51 = vector.shape_cast %45 : vector<5x256xf32> to vector<1x5x256xf32>
    tpu.vector_store %arg11[%c0_28, %c0_29, %c0_30], %51 {strides = array<i32>} : memref<1x5x256xf32, #tpu.memory_space<vmem>>, vector<1x5x256xf32>,
    return
  }
  func.func @transform_0(%arg0: i32) -> (i32, i32) {
    %c0_i32 = arith.constant 0 : i32
    %c0_i32_0 = arith.constant 0 : i32
    %c0_i32_1 = arith.constant 0 : i32
    return %c0_i32, %c0_i32_0 : i32, i32
  }
  func.func @transform_1(%arg0: i32) -> (i32, i32, i32) {
    %c0_i32 = arith.constant 0 : i32
    %c0_i32_0 = arith.constant 0 : i32
    %c0_i32_1 = arith.constant 0 : i32
    return %arg0, %c0_i32, %c0_i32_0 : i32, i32, i32
  }
  func.func @transform_2(%arg0: i32) -> (i32, i32, i32) {
    %c0_i32 = arith.constant 0 : i32
    %c0_i32_0 = arith.constant 0 : i32
    %c0_i32_1 = arith.constant 0 : i32
    return %arg0, %c0_i32, %c0_i32_0 : i32, i32, i32
  }
  func.func @transform_3(%arg0: i32) -> (i32, i32) {
    %c0_i32 = arith.constant 0 : i32
    %c0_i32_0 = arith.constant 0 : i32
    %c0_i32_1 = arith.constant 0 : i32
    return %c0_i32, %c0_i32_0 : i32, i32
  }
  func.func @transform_4(%arg0: i32) -> (i32, i32) {
    %c0_i32 = arith.constant 0 : i32
    %c0_i32_0 = arith.constant 0 : i32
    %c0_i32_1 = arith.constant 0 : i32
    return %c0_i32, %c0_i32_0 : i32, i32
  }
  func.func @transform_5(%arg0: i32) -> (i32, i32) {
    %c0_i32 = arith.constant 0 : i32
    %c0_i32_0 = arith.constant 0 : i32
    %c0_i32_1 = arith.constant 0 : i32
    return %c0_i32, %c0_i32_0 : i32, i32
  }
  func.func @transform_6(%arg0: i32) -> (i32, i32) {
    %c0_i32 = arith.constant 0 : i32
    %c0_i32_0 = arith.constant 0 : i32
    %c0_i32_1 = arith.constant 0 : i32
    return %c0_i32, %c0_i32_0 : i32, i32
  }
  func.func @transform_7(%arg0: i32) -> (i32, i32) {
    %c0_i32 = arith.constant 0 : i32
    %c0_i32_0 = arith.constant 0 : i32
    %c0_i32_1 = arith.constant 0 : i32
    return %c0_i32, %c0_i32_0 : i32, i32
  }
  func.func @transform_8(%arg0: i32) -> (i32, i32) {
    %c0_i32 = arith.constant 0 : i32
    %c0_i32_0 = arith.constant 0 : i32
    %c0_i32_1 = arith.constant 0 : i32
    return %c0_i32, %c0_i32_0 : i32, i32
  }
  func.func @transform_9(%arg0: i32) -> (i32, i32, i32) {
    %c0_i32 = arith.constant 0 : i32
    %c0_i32_0 = arith.constant 0 : i32
    %c0_i32_1 = arith.constant 0 : i32
    return %arg0, %c0_i32, %c0_i32_0 : i32, i32, i32
  }
  func.func @transform_10(%arg0: i32) -> (i32, i32, i32) {
    %c0_i32 = arith.constant 0 : i32
    %c0_i32_0 = arith.constant 0 : i32
    %c0_i32_1 = arith.constant 0 : i32
    return %arg0, %c0_i32, %c0_i32_0 : i32, i32, i32
  }
}

module attributes {stable_mosaic.version = 11 : i64} {
  func.func @_synthesis_kernel(%arg0: i32, %arg1: memref<1x18x256xf32, #tpu.memory_space<vmem>>, %arg2: memref<1x5x256xf32, #tpu.memory_space<vmem>>, %arg3: memref<1x1x256xf32, #tpu.memory_space<vmem>>, %arg4: memref<1x1x18xf32, #tpu.memory_space<vmem>>, %arg5: memref<1x1x32xf32, #tpu.memory_space<vmem>>, %arg6: memref<1x1x32xf32, #tpu.memory_space<vmem>>, %arg7: memref<1x1x32xf32, #tpu.memory_space<vmem>>, %arg8: memref<32x18xf32, #tpu.memory_space<vmem>>, %arg9: memref<32x1xf32, #tpu.memory_space<vmem>>, %arg10: memref<3x32xf32, #tpu.memory_space<vmem>>, %arg11: memref<3x1xf32, #tpu.memory_space<vmem>>, %arg12: memref<3x5xf32, #tpu.memory_space<vmem>>, %arg13: memref<3x1xf32, #tpu.memory_space<vmem>>, %arg14: memref<32x32xf32, #tpu.memory_space<vmem>>, %arg15: memref<32x1xf32, #tpu.memory_space<vmem>>, %arg16: memref<3x32xf32, #tpu.memory_space<vmem>>, %arg17: memref<3x1xf32, #tpu.memory_space<vmem>>, %arg18: memref<1x1xf32, #tpu.memory_space<vmem>>, %arg19: memref<1x3x256xf32, #tpu.memory_space<vmem>>) attributes {dimension_semantics = [#tpu.dimension_semantics<parallel>], iteration_bounds = array<i64: 2>, scalar_prefetch = 0 : i64, scratch_operands = 0 : i64, tpu.core_type = #tpu.core_type<tc>, window_params = [{transform_indices = @transform_0, window_bounds = array<i64: 1, 18, 256>}, {transform_indices = @transform_1, window_bounds = array<i64: 1, 5, 256>}, {transform_indices = @transform_2, window_bounds = array<i64: 1, 1, 256>}, {transform_indices = @transform_3, window_bounds = array<i64: 1, 1, 18>}, {transform_indices = @transform_4, window_bounds = array<i64: 1, 1, 32>}, {transform_indices = @transform_5, window_bounds = array<i64: 1, 1, 32>}, {transform_indices = @transform_6, window_bounds = array<i64: 1, 1, 32>}, {pipeline_mode = #tpu.pipeline_mode<synchronous>, transform_indices = @transform_7, window_bounds = array<i64: 32, 18>}, {pipeline_mode = #tpu.pipeline_mode<synchronous>, transform_indices = @transform_8, window_bounds = array<i64: 32, 1>}, {pipeline_mode = #tpu.pipeline_mode<synchronous>, transform_indices = @transform_9, window_bounds = array<i64: 3, 32>}, {pipeline_mode = #tpu.pipeline_mode<synchronous>, transform_indices = @transform_10, window_bounds = array<i64: 3, 1>}, {pipeline_mode = #tpu.pipeline_mode<synchronous>, transform_indices = @transform_11, window_bounds = array<i64: 3, 5>}, {pipeline_mode = #tpu.pipeline_mode<synchronous>, transform_indices = @transform_12, window_bounds = array<i64: 3, 1>}, {pipeline_mode = #tpu.pipeline_mode<synchronous>, transform_indices = @transform_13, window_bounds = array<i64: 32, 32>}, {pipeline_mode = #tpu.pipeline_mode<synchronous>, transform_indices = @transform_14, window_bounds = array<i64: 32, 1>}, {pipeline_mode = #tpu.pipeline_mode<synchronous>, transform_indices = @transform_15, window_bounds = array<i64: 3, 32>}, {pipeline_mode = #tpu.pipeline_mode<synchronous>, transform_indices = @transform_16, window_bounds = array<i64: 3, 1>}, {pipeline_mode = #tpu.pipeline_mode<synchronous>, transform_indices = @transform_17, window_bounds = array<i64: 1, 1>}, {transform_indices = @transform_18, window_bounds = array<i64: 1, 3, 256>}]} {
    %c0 = arith.constant 0 : index
    %c0_0 = arith.constant 0 : index
    %c0_1 = arith.constant 0 : index
    %0 = vector.load %arg1[%c0, %c0_0, %c0_1] : memref<1x18x256xf32, #tpu.memory_space<vmem>>, vector<1x18x256xf32>
    %1 = vector.shape_cast %0 : vector<1x18x256xf32> to vector<18x256xf32>
    %c0_2 = arith.constant 0 : index
    %c0_3 = arith.constant 0 : index
    %c0_4 = arith.constant 0 : index
    %2 = vector.load %arg2[%c0_2, %c0_3, %c0_4] : memref<1x5x256xf32, #tpu.memory_space<vmem>>, vector<1x5x256xf32>
    %3 = vector.shape_cast %2 : vector<1x5x256xf32> to vector<5x256xf32>
    %c0_5 = arith.constant 0 : index
    %c0_6 = arith.constant 0 : index
    %c0_7 = arith.constant 0 : index
    %4 = vector.load %arg3[%c0_5, %c0_6, %c0_7] : memref<1x1x256xf32, #tpu.memory_space<vmem>>, vector<1x1x256xf32>
    %5 = vector.shape_cast %4 : vector<1x1x256xf32> to vector<1x256xf32>
    %c0_8 = arith.constant 0 : index
    %c0_9 = arith.constant 0 : index
    %6 = vector.load %arg8[%c0_8, %c0_9] : memref<32x18xf32, #tpu.memory_space<vmem>>, vector<32x18xf32>
    %c0_10 = arith.constant 0 : index
    %c0_11 = arith.constant 0 : index
    %c0_12 = arith.constant 0 : index
    %7 = vector.load %arg4[%c0_10, %c0_11, %c0_12] : memref<1x1x18xf32, #tpu.memory_space<vmem>>, vector<1x1x18xf32>
    %8 = vector.shape_cast %7 : vector<1x1x18xf32> to vector<1x18xf32>
    %c0_13 = arith.constant 0 : index
    %c0_14 = arith.constant 0 : index
    %9 = vector.load %arg9[%c0_13, %c0_14] : memref<32x1xf32, #tpu.memory_space<vmem>>, vector<32x1xf32>
    %10 = vector.broadcast %8 : vector<1x18xf32> to vector<32x18xf32>
    %11 = arith.mulf %6, %10 : vector<32x18xf32>
    %12 = arith.truncf %11 : vector<32x18xf32> to vector<32x18xbf16>
    %13 = arith.truncf %1 : vector<18x256xf32> to vector<18x256xbf16>
    %cst = arith.constant dense<0.000000e+00> : vector<32x256xf32>
    %14 = tpu.matmul %12, %13, %cst {dimension_numbers = #tpu.dot_dimension_numbers<[1], [0], [0], [1], [0, 0, 1, 1], [], []>} : vector<32x18xbf16>, vector<18x256xbf16>, vector<32x256xf32> -> vector<32x256xf32>
    %15 = arith.mulf %11, %11 : vector<32x18xf32>
    %cst_15 = arith.constant dense<0.000000e+00> : vector<32xf32>
    %16 = vector.multi_reduction <add>, %15, %cst_15 [1] : vector<32x18xf32> to vector<32xf32>
    %17 = vector.shape_cast %16 : vector<32xf32> to vector<32x1xf32>
    %cst_16 = arith.constant 9.99999993E-9 : f32
    %18 = vector.broadcast %cst_16 : f32 to vector<32x1xf32>
    %19 = arith.addf %17, %18 : vector<32x1xf32>
    %20 = math.rsqrt %19 : vector<32x1xf32>
    %21 = vector.broadcast %20 : vector<32x1xf32> to vector<32x256xf32>
    %22 = arith.mulf %14, %21 : vector<32x256xf32>
    %23 = vector.broadcast %9 : vector<32x1xf32> to vector<32x256xf32>
    %24 = arith.addf %22, %23 : vector<32x256xf32>
    %cst_17 = arith.constant 0.000000e+00 : f32
    %25 = vector.broadcast %cst_17 : f32 to vector<32x256xf32>
    %26 = arith.cmpf oge, %24, %25 : vector<32x256xf32>
    %cst_18 = arith.constant 2.000000e-01 : f32
    %27 = vector.broadcast %cst_18 : f32 to vector<32x256xf32>
    %28 = arith.mulf %27, %24 : vector<32x256xf32>
    %29 = arith.select %26, %24, %28 : vector<32x256xi1>, vector<32x256xf32>
    %cst_19 = arith.constant 1.41421354 : f32
    %30 = vector.broadcast %cst_19 : f32 to vector<32x256xf32>
    %31 = arith.mulf %29, %30 : vector<32x256xf32>
    %c0_20 = arith.constant 0 : index
    %c0_21 = arith.constant 0 : index
    %32 = vector.load %arg18[%c0_20, %c0_21] : memref<1x1xf32, #tpu.memory_space<vmem>>, vector<1x1xf32>
    %33 = vector.broadcast %32 : vector<1x1xf32> to vector<1x256xf32>
    %34 = arith.mulf %33, %5 : vector<1x256xf32>
    %35 = vector.broadcast %34 : vector<1x256xf32> to vector<32x256xf32>
    %36 = arith.addf %31, %35 : vector<32x256xf32>
    %c0_22 = arith.constant 0 : index
    %c0_23 = arith.constant 0 : index
    %37 = vector.load %arg10[%c0_22, %c0_23] : memref<3x32xf32, #tpu.memory_space<vmem>>, vector<3x32xf32>
    %c0_24 = arith.constant 0 : index
    %c0_25 = arith.constant 0 : index
    %c0_26 = arith.constant 0 : index
    %38 = vector.load %arg5[%c0_24, %c0_25, %c0_26] : memref<1x1x32xf32, #tpu.memory_space<vmem>>, vector<1x1x32xf32>
    %39 = vector.shape_cast %38 : vector<1x1x32xf32> to vector<1x32xf32>
    %c0_27 = arith.constant 0 : index
    %c0_28 = arith.constant 0 : index
    %40 = vector.load %arg11[%c0_27, %c0_28] : memref<3x1xf32, #tpu.memory_space<vmem>>, vector<3x1xf32>
    %41 = vector.broadcast %39 : vector<1x32xf32> to vector<3x32xf32>
    %42 = arith.mulf %37, %41 : vector<3x32xf32>
    %43 = arith.truncf %42 : vector<3x32xf32> to vector<3x32xbf16>
    %44 = arith.truncf %36 : vector<32x256xf32> to vector<32x256xbf16>
    %cst_29 = arith.constant dense<0.000000e+00> : vector<3x256xf32>
    %45 = tpu.matmul %43, %44, %cst_29 {dimension_numbers = #tpu.dot_dimension_numbers<[1], [0], [0], [1], [0, 0, 1, 1], [], []>} : vector<3x32xbf16>, vector<32x256xbf16>, vector<3x256xf32> -> vector<3x256xf32>
    %46 = vector.broadcast %40 : vector<3x1xf32> to vector<3x256xf32>
    %47 = arith.addf %45, %46 : vector<3x256xf32>
    %c0_30 = arith.constant 0 : index
    %c0_31 = arith.constant 0 : index
    %48 = vector.load %arg12[%c0_30, %c0_31] : memref<3x5xf32, #tpu.memory_space<vmem>>, vector<3x5xf32>
    %49 = arith.truncf %48 : vector<3x5xf32> to vector<3x5xbf16>
    %50 = arith.truncf %3 : vector<5x256xf32> to vector<5x256xbf16>
    %cst_32 = arith.constant dense<0.000000e+00> : vector<3x256xf32>
    %51 = tpu.matmul %49, %50, %cst_32 {dimension_numbers = #tpu.dot_dimension_numbers<[1], [0], [0], [1], [0, 0, 1, 1], [], []>} : vector<3x5xbf16>, vector<5x256xbf16>, vector<3x256xf32> -> vector<3x256xf32>
    %c0_33 = arith.constant 0 : index
    %c0_34 = arith.constant 0 : index
    %52 = vector.load %arg13[%c0_33, %c0_34] : memref<3x1xf32, #tpu.memory_space<vmem>>, vector<3x1xf32>
    %53 = vector.broadcast %52 : vector<3x1xf32> to vector<3x256xf32>
    %54 = arith.addf %51, %53 : vector<3x256xf32>
    %55 = arith.addf %54, %47 : vector<3x256xf32>
    %c0_35 = arith.constant 0 : index
    %c0_36 = arith.constant 0 : index
    %56 = vector.load %arg14[%c0_35, %c0_36] : memref<32x32xf32, #tpu.memory_space<vmem>>, vector<32x32xf32>
    %c0_37 = arith.constant 0 : index
    %c0_38 = arith.constant 0 : index
    %c0_39 = arith.constant 0 : index
    %57 = vector.load %arg6[%c0_37, %c0_38, %c0_39] : memref<1x1x32xf32, #tpu.memory_space<vmem>>, vector<1x1x32xf32>
    %58 = vector.shape_cast %57 : vector<1x1x32xf32> to vector<1x32xf32>
    %c0_40 = arith.constant 0 : index
    %c0_41 = arith.constant 0 : index
    %59 = vector.load %arg15[%c0_40, %c0_41] : memref<32x1xf32, #tpu.memory_space<vmem>>, vector<32x1xf32>
    %60 = vector.broadcast %58 : vector<1x32xf32> to vector<32x32xf32>
    %61 = arith.mulf %56, %60 : vector<32x32xf32>
    %62 = arith.truncf %61 : vector<32x32xf32> to vector<32x32xbf16>
    %63 = arith.truncf %36 : vector<32x256xf32> to vector<32x256xbf16>
    %cst_42 = arith.constant dense<0.000000e+00> : vector<32x256xf32>
    %64 = tpu.matmul %62, %63, %cst_42 {dimension_numbers = #tpu.dot_dimension_numbers<[1], [0], [0], [1], [0, 0, 1, 1], [], []>} : vector<32x32xbf16>, vector<32x256xbf16>, vector<32x256xf32> -> vector<32x256xf32>
    %65 = arith.mulf %61, %61 : vector<32x32xf32>
    %cst_43 = arith.constant dense<0.000000e+00> : vector<32xf32>
    %66 = vector.multi_reduction <add>, %65, %cst_43 [1] : vector<32x32xf32> to vector<32xf32>
    %67 = vector.shape_cast %66 : vector<32xf32> to vector<32x1xf32>
    %cst_44 = arith.constant 9.99999993E-9 : f32
    %68 = vector.broadcast %cst_44 : f32 to vector<32x1xf32>
    %69 = arith.addf %67, %68 : vector<32x1xf32>
    %70 = math.rsqrt %69 : vector<32x1xf32>
    %71 = vector.broadcast %70 : vector<32x1xf32> to vector<32x256xf32>
    %72 = arith.mulf %64, %71 : vector<32x256xf32>
    %73 = vector.broadcast %59 : vector<32x1xf32> to vector<32x256xf32>
    %74 = arith.addf %72, %73 : vector<32x256xf32>
    %cst_45 = arith.constant 0.000000e+00 : f32
    %75 = vector.broadcast %cst_45 : f32 to vector<32x256xf32>
    %76 = arith.cmpf oge, %74, %75 : vector<32x256xf32>
    %cst_46 = arith.constant 2.000000e-01 : f32
    %77 = vector.broadcast %cst_46 : f32 to vector<32x256xf32>
    %78 = arith.mulf %77, %74 : vector<32x256xf32>
    %79 = arith.select %76, %74, %78 : vector<32x256xi1>, vector<32x256xf32>
    %cst_47 = arith.constant 1.41421354 : f32
    %80 = vector.broadcast %cst_47 : f32 to vector<32x256xf32>
    %81 = arith.mulf %79, %80 : vector<32x256xf32>
    %c0_48 = arith.constant 0 : index
    %c0_49 = arith.constant 0 : index
    %82 = vector.load %arg16[%c0_48, %c0_49] : memref<3x32xf32, #tpu.memory_space<vmem>>, vector<3x32xf32>
    %c0_50 = arith.constant 0 : index
    %c0_51 = arith.constant 0 : index
    %c0_52 = arith.constant 0 : index
    %83 = vector.load %arg7[%c0_50, %c0_51, %c0_52] : memref<1x1x32xf32, #tpu.memory_space<vmem>>, vector<1x1x32xf32>
    %84 = vector.shape_cast %83 : vector<1x1x32xf32> to vector<1x32xf32>
    %c0_53 = arith.constant 0 : index
    %c0_54 = arith.constant 0 : index
    %85 = vector.load %arg17[%c0_53, %c0_54] : memref<3x1xf32, #tpu.memory_space<vmem>>, vector<3x1xf32>
    %86 = vector.broadcast %84 : vector<1x32xf32> to vector<3x32xf32>
    %87 = arith.mulf %82, %86 : vector<3x32xf32>
    %88 = arith.truncf %87 : vector<3x32xf32> to vector<3x32xbf16>
    %89 = arith.truncf %81 : vector<32x256xf32> to vector<32x256xbf16>
    %cst_55 = arith.constant dense<0.000000e+00> : vector<3x256xf32>
    %90 = tpu.matmul %88, %89, %cst_55 {dimension_numbers = #tpu.dot_dimension_numbers<[1], [0], [0], [1], [0, 0, 1, 1], [], []>} : vector<3x32xbf16>, vector<32x256xbf16>, vector<3x256xf32> -> vector<3x256xf32>
    %91 = vector.broadcast %85 : vector<3x1xf32> to vector<3x256xf32>
    %92 = arith.addf %90, %91 : vector<3x256xf32>
    %93 = arith.addf %55, %92 : vector<3x256xf32>
    %c0_56 = arith.constant 0 : index
    %c0_57 = arith.constant 0 : index
    %c0_58 = arith.constant 0 : index
    %94 = vector.load %arg19[%c0_56, %c0_57, %c0_58] : memref<1x3x256xf32, #tpu.memory_space<vmem>>, vector<1x3x256xf32>
    %95 = vector.shape_cast %94 : vector<1x3x256xf32> to vector<3x256xf32>
    %96 = vector.shape_cast %93 : vector<3x256xf32> to vector<1x3x256xf32>
    tpu.vector_store %arg19[%c0_56, %c0_57, %c0_58], %96 {strides = array<i32>} : memref<1x3x256xf32, #tpu.memory_space<vmem>>, vector<1x3x256xf32>,
    return
  }
  func.func @transform_0(%arg0: i32) -> (i32, i32, i32) {
    %c0_i32 = arith.constant 0 : i32
    %c0_i32_0 = arith.constant 0 : i32
    %c0_i32_1 = arith.constant 0 : i32
    return %arg0, %c0_i32, %c0_i32_0 : i32, i32, i32
  }
  func.func @transform_1(%arg0: i32) -> (i32, i32, i32) {
    %c0_i32 = arith.constant 0 : i32
    %c0_i32_0 = arith.constant 0 : i32
    %c0_i32_1 = arith.constant 0 : i32
    return %arg0, %c0_i32, %c0_i32_0 : i32, i32, i32
  }
  func.func @transform_2(%arg0: i32) -> (i32, i32, i32) {
    %c0_i32 = arith.constant 0 : i32
    %c0_i32_0 = arith.constant 0 : i32
    %c0_i32_1 = arith.constant 0 : i32
    return %arg0, %c0_i32, %c0_i32_0 : i32, i32, i32
  }
  func.func @transform_3(%arg0: i32) -> (i32, i32, i32) {
    %c0_i32 = arith.constant 0 : i32
    %c0_i32_0 = arith.constant 0 : i32
    %c0_i32_1 = arith.constant 0 : i32
    return %arg0, %c0_i32, %c0_i32_0 : i32, i32, i32
  }
  func.func @transform_4(%arg0: i32) -> (i32, i32, i32) {
    %c0_i32 = arith.constant 0 : i32
    %c0_i32_0 = arith.constant 0 : i32
    %c0_i32_1 = arith.constant 0 : i32
    return %arg0, %c0_i32, %c0_i32_0 : i32, i32, i32
  }
  func.func @transform_5(%arg0: i32) -> (i32, i32, i32) {
    %c0_i32 = arith.constant 0 : i32
    %c0_i32_0 = arith.constant 0 : i32
    %c0_i32_1 = arith.constant 0 : i32
    return %arg0, %c0_i32, %c0_i32_0 : i32, i32, i32
  }
  func.func @transform_6(%arg0: i32) -> (i32, i32, i32) {
    %c0_i32 = arith.constant 0 : i32
    %c0_i32_0 = arith.constant 0 : i32
    %c0_i32_1 = arith.constant 0 : i32
    return %arg0, %c0_i32, %c0_i32_0 : i32, i32, i32
  }
  func.func @transform_7(%arg0: i32) -> (i32, i32) {
    %c0_i32 = arith.constant 0 : i32
    %c0_i32_0 = arith.constant 0 : i32
    %c0_i32_1 = arith.constant 0 : i32
    return %c0_i32, %c0_i32_0 : i32, i32
  }
  func.func @transform_8(%arg0: i32) -> (i32, i32) {
    %c0_i32 = arith.constant 0 : i32
    %c0_i32_0 = arith.constant 0 : i32
    %c0_i32_1 = arith.constant 0 : i32
    return %c0_i32, %c0_i32_0 : i32, i32
  }
  func.func @transform_9(%arg0: i32) -> (i32, i32) {
    %c0_i32 = arith.constant 0 : i32
    %c0_i32_0 = arith.constant 0 : i32
    %c0_i32_1 = arith.constant 0 : i32
    return %c0_i32, %c0_i32_0 : i32, i32
  }
  func.func @transform_10(%arg0: i32) -> (i32, i32) {
    %c0_i32 = arith.constant 0 : i32
    %c0_i32_0 = arith.constant 0 : i32
    %c0_i32_1 = arith.constant 0 : i32
    return %c0_i32, %c0_i32_0 : i32, i32
  }
  func.func @transform_11(%arg0: i32) -> (i32, i32) {
    %c0_i32 = arith.constant 0 : i32
    %c0_i32_0 = arith.constant 0 : i32
    %c0_i32_1 = arith.constant 0 : i32
    return %c0_i32, %c0_i32_0 : i32, i32
  }
  func.func @transform_12(%arg0: i32) -> (i32, i32) {
    %c0_i32 = arith.constant 0 : i32
    %c0_i32_0 = arith.constant 0 : i32
    %c0_i32_1 = arith.constant 0 : i32
    return %c0_i32, %c0_i32_0 : i32, i32
  }
  func.func @transform_13(%arg0: i32) -> (i32, i32) {
    %c0_i32 = arith.constant 0 : i32
    %c0_i32_0 = arith.constant 0 : i32
    %c0_i32_1 = arith.constant 0 : i32
    return %c0_i32, %c0_i32_0 : i32, i32
  }
  func.func @transform_14(%arg0: i32) -> (i32, i32) {
    %c0_i32 = arith.constant 0 : i32
    %c0_i32_0 = arith.constant 0 : i32
    %c0_i32_1 = arith.constant 0 : i32
    return %c0_i32, %c0_i32_0 : i32, i32
  }
  func.func @transform_15(%arg0: i32) -> (i32, i32) {
    %c0_i32 = arith.constant 0 : i32
    %c0_i32_0 = arith.constant 0 : i32
    %c0_i32_1 = arith.constant 0 : i32
    return %c0_i32, %c0_i32_0 : i32, i32
  }
  func.func @transform_16(%arg0: i32) -> (i32, i32) {
    %c0_i32 = arith.constant 0 : i32
    %c0_i32_0 = arith.constant 0 : i32
    %c0_i32_1 = arith.constant 0 : i32
    return %c0_i32, %c0_i32_0 : i32, i32
  }
  func.func @transform_17(%arg0: i32) -> (i32, i32) {
    %c0_i32 = arith.constant 0 : i32
    %c0_i32_0 = arith.constant 0 : i32
    %c0_i32_1 = arith.constant 0 : i32
    return %c0_i32, %c0_i32_0 : i32, i32
  }
  func.func @transform_18(%arg0: i32) -> (i32, i32, i32) {
    %c0_i32 = arith.constant 0 : i32
    %c0_i32_0 = arith.constant 0 : i32
    %c0_i32_1 = arith.constant 0 : i32
    return %arg0, %c0_i32, %c0_i32_0 : i32, i32, i32
  }
}

</mosaic_0001>

<llo_original>
// kernel: _lambda_.3
$region0: #{_lambda_.3}
  #allocation0 [shape = 'u32[]', space=smem, size = 0x4, offset = 0x4, fixed_abs, tag = 'smem constant byte address 0x4 - core index']
  #allocation1 [shape = 'u32[144,128]{1,0:T(1,128)}', space=vmem, size = 0x12000, scoped, tag = 'internal scratch']
  #allocation2 [shape = 'f32[1,1]{1,0:T(1,128)S(1)}', space=vmem, size = 0x200, scoped, tag = 'scoped memory for _lambda_.3']
  %s0 = inlined_call_operand.vmem [shape: f32[2,18,256], index: 0, kind: input, shape index: {}]
  %s1 = inlined_call_operand.vmem [shape: f32[2,5,256], index: 1, kind: input, shape index: {}]
  %s2 = inlined_call_operand.vmem [shape: f32[2,1,256], index: 2, kind: input, shape index: {}]
  %s3 = inlined_call_operand.vmem [shape: f32[2,1,18], index: 3, kind: input, shape index: {}]
  %s4 = inlined_call_operand.vmem [shape: f32[2,1,32], index: 4, kind: input, shape index: {}]
  %s5 = inlined_call_operand.vmem [shape: f32[2,1,32], index: 5, kind: input, shape index: {}]
  %s6 = inlined_call_operand.vmem [shape: f32[2,1,32], index: 6, kind: input, shape index: {}]
  %s7 = inlined_call_operand.vmem [shape: f32[32,18], index: 7, kind: input, shape index: {}]
  %s8 = inlined_call_operand.vmem [shape: f32[32,1], index: 8, kind: input, shape index: {}, may-alias: {8,14}]
  %s9 = inlined_call_operand.vmem [shape: f32[3,32], index: 9, kind: input, shape index: {}]
  %s10 = inlined_call_operand.vmem [shape: f32[3,1], index: 10, kind: input, shape index: {}, may-alias: {10,12,16}]
  %s11 = inlined_call_operand.vmem [shape: f32[3,5], index: 11, kind: input, shape index: {}]
  %s12 = inlined_call_operand.vmem [shape: f32[3,1], index: 12, kind: input, shape index: {}, may-alias: {10,12,16}]
  %s13 = inlined_call_operand.vmem [shape: f32[32,32], index: 13, kind: input, shape index: {}]
  %s14 = inlined_call_operand.vmem [shape: f32[32,1], index: 14, kind: input, shape index: {}, may-alias: {8,14}]
  %s15 = inlined_call_operand.vmem [shape: f32[3,32], index: 15, kind: input, shape index: {}]
  %s16 = inlined_call_operand.vmem [shape: f32[3,1], index: 16, kind: input, shape index: {}, may-alias: {10,12,16}]
  %s17 = inlined_call_operand.<no memory space> [shape: f32[1,1], index: 17, kind: input, shape index: {}]
  %s18 = inlined_call_operand.vmem [shape: f32[2,3,256], index: 18, kind: output, shape index: {}]
  %s19 = sld [smem:[#allocation0]]
  $region105: #{_lambda_.3} parent=0
    _
  %s21 = ssub.s32 1, %s19
  %s22 = scalar_select 0, %s21, %s19
  %v23 = vstv %s17
  %24 = vst [vmem:[#allocation2] sm:$0x1] %v23
  loop: start=0, step=1, limit=4
  $region2: #{_lambda_.3} parent=0 // loop_pre_header
    _
  $region3: #{_lambda_.3} parent=0 // loop_header
    %s26 = sphi 0, %s30
    %p27 = scmp.ge.s32.totalorder %s26, 4
    %s36 = sphi 0, %s38
    %s39 = sphi 0, %s36
    %s40 = sphi 0, %s39
    %s56 = sphi 0, %s40
    %s62 = sphi 0, %s64
    %s65 = sphi 0, %s62
    %s66 = sphi 0, %s65
    %s82 = sphi 0, %s66
    %s88 = sphi 0, %s90
    %s91 = sphi 0, %s88
    %s92 = sphi 0, %s91
    %s108 = sphi 0, %s92
    %s114 = sphi 0, %s116
    %s117 = sphi 0, %s114
    %s118 = sphi 0, %s117
    %s134 = sphi 0, %s118
    %s140 = sphi 0, %s142
    %s143 = sphi 0, %s140
    %s144 = sphi 0, %s143
    %s160 = sphi 0, %s144
    %s166 = sphi 0, %s168
    %s169 = sphi 0, %s166
    %s170 = sphi 0, %s169
    %s186 = sphi 0, %s170
    %s192 = sphi 0, %s194
    %s195 = sphi 0, %s192
    %s196 = sphi 0, %s195
    %s212 = sphi 0, %s196
    %s216 = sphi 0, %s216
    %s218 = sphi 0, %s216
    %s219 = sphi 0, %s218
    %s233 = sphi 0, %s219
    %s237 = sphi 0, %s237
    %s239 = sphi 0, %s237
    %s240 = sphi 0, %s239
    %s254 = sphi 0, %s240
    %s258 = sphi 0, %s258
    %s260 = sphi 0, %s258
    %s261 = sphi 0, %s260
    %s275 = sphi 0, %s261
    %s279 = sphi 0, %s279
    %s281 = sphi 0, %s279
    %s282 = sphi 0, %s281
    %s296 = sphi 0, %s282
    %s300 = sphi 0, %s300
    %s302 = sphi 0, %s300
    %s303 = sphi 0, %s302
    %s317 = sphi 0, %s303
    %s321 = sphi 0, %s321
    %s323 = sphi 0, %s321
    %s324 = sphi 0, %s323
    %s338 = sphi 0, %s324
    %s342 = sphi 0, %s342
    %s344 = sphi 0, %s342
    %s345 = sphi 0, %s344
    %s359 = sphi 0, %s345
    %s363 = sphi 0, %s363
    %s365 = sphi 0, %s363
    %s366 = sphi 0, %s365
    %s380 = sphi 0, %s366
    %s384 = sphi 0, %s384
    %s386 = sphi 0, %s384
    %s387 = sphi 0, %s386
    %s401 = sphi 0, %s387
    %s405 = sphi 0, %s405
    %s407 = sphi 0, %s405
    %s408 = sphi 0, %s407
    %s422 = sphi 0, %s408
    %s426 = sphi 0, %s426
    %s428 = sphi 0, %s426
    %s429 = sphi 0, %s428
    %s443 = sphi 0, %s429
    %s449 = sphi 0, %s451
    %s452 = sphi 0, %s449
    %s453 = sphi 0, %s452
    %s469 = sphi 0, %s453
  $region4: #{_lambda_.3} parent=0 // loop_header_branch
    %29 = sbr.rel (%p27) target = $region8
  $region5: #{_lambda_.3} parent=0 // loop_body
    %s31 = ssub.s32 %s26, 1
    %s32 = ssub.s32 %s26, 2
    %s33 = sadd.s32 %s26, 1
    %s34 = ssub.s32 %s26, %s33
    %p35 = scmp.eq.s32.totalorder %s34, 0
    %s37 = sadd.s32 %s36, 1
    %s38 = scalar_select %p35, %s36, %s37
    %p41 = pneg %p35
    %p42 = scmp.eq.s32.totalorder %s26, 1
    %p43 = por %p41, %p42
    %p44 = scmp.ne.s32.totalorder %s36, %s39
    %p45 = scmp.eq.s32.totalorder %s26, 0
    %p46 = por %p44, %p45
    %p47 = scmp.ne.s32.totalorder %s36, %s39
    %p48 = scmp.eq.s32.totalorder %s31, 1
    %p49 = por %p47, %p48
    %p50 = scmp.ne.s32.totalorder %s39, %s40
    %p51 = scmp.eq.s32.totalorder %s31, 0
    %p52 = por %p50, %p51
    %p53 = scmp.ne.s32.totalorder %s39, %s40
    %p54 = scmp.eq.s32.totalorder %s32, 1
    %p55 = por %p53, %p54
    %p57 = scmp.ne.s32.totalorder %s40, %s56
    %p58 = scmp.eq.s32.totalorder %s32, 0
    %p59 = por %p57, %p58
    %s60 = ssub.s32 %s26, %s33
    %p61 = scmp.eq.s32.totalorder %s60, 0
    %s63 = sadd.s32 %s62, 1
    %s64 = scalar_select %p61, %s62, %s63
    %p67 = pneg %p61
    %p68 = scmp.eq.s32.totalorder %s26, 1
    %p69 = por %p67, %p68
    %p70 = scmp.ne.s32.totalorder %s62, %s65
    %p71 = scmp.eq.s32.totalorder %s26, 0
    %p72 = por %p70, %p71
    %p73 = scmp.ne.s32.totalorder %s62, %s65
    %p74 = scmp.eq.s32.totalorder %s31, 1
    %p75 = por %p73, %p74
    %p76 = scmp.ne.s32.totalorder %s65, %s66
    %p77 = scmp.eq.s32.totalorder %s31, 0
    %p78 = por %p76, %p77
    %p79 = scmp.ne.s32.totalorder %s65, %s66
    %p80 = scmp.eq.s32.totalorder %s32, 1
    %p81 = por %p79, %p80
    %p83 = scmp.ne.s32.totalorder %s66, %s82
    %p84 = scmp.eq.s32.totalorder %s32, 0
    %p85 = por %p83, %p84
    %s86 = ssub.s32 %s26, %s33
    %p87 = scmp.eq.s32.totalorder %s86, 0
    %s89 = sadd.s32 %s88, 1
    %s90 = scalar_select %p87, %s88, %s89
    %p93 = pneg %p87
    %p94 = scmp.eq.s32.totalorder %s26, 1
    %p95 = por %p93, %p94
    %p96 = scmp.ne.s32.totalorder %s88, %s91
    %p97 = scmp.eq.s32.totalorder %s26, 0
    %p98 = por %p96, %p97
    %p99 = scmp.ne.s32.totalorder %s88, %s91
    %p100 = scmp.eq.s32.totalorder %s31, 1
    %p101 = por %p99, %p100
    %p102 = scmp.ne.s32.totalorder %s91, %s92
    %p103 = scmp.eq.s32.totalorder %s31, 0
    %p104 = por %p102, %p103
    %p105 = scmp.ne.s32.totalorder %s91, %s92
    %p106 = scmp.eq.s32.totalorder %s32, 1
    %p107 = por %p105, %p106
    %p109 = scmp.ne.s32.totalorder %s92, %s108
    %p110 = scmp.eq.s32.totalorder %s32, 0
    %p111 = por %p109, %p110
    %s112 = ssub.s32 %s26, %s33
    %p113 = scmp.eq.s32.totalorder %s112, 0
    %s115 = sadd.s32 %s114, 1
    %s116 = scalar_select %p113, %s114, %s115
    %p119 = pneg %p113
    %p120 = scmp.eq.s32.totalorder %s26, 1
    %p121 = por %p119, %p120
    %p122 = scmp.ne.s32.totalorder %s114, %s117
    %p123 = scmp.eq.s32.totalorder %s26, 0
    %p124 = por %p122, %p123
    %p125 = scmp.ne.s32.totalorder %s114, %s117
    %p126 = scmp.eq.s32.totalorder %s31, 1
    %p127 = por %p125, %p126
    %p128 = scmp.ne.s32.totalorder %s117, %s118
    %p129 = scmp.eq.s32.totalorder %s31, 0
    %p130 = por %p128, %p129
    %p131 = scmp.ne.s32.totalorder %s117, %s118
    %p132 = scmp.eq.s32.totalorder %s32, 1
    %p133 = por %p131, %p132
    %p135 = scmp.ne.s32.totalorder %s118, %s134
    %p136 = scmp.eq.s32.totalorder %s32, 0
    %p137 = por %p135, %p136
    %s138 = ssub.s32 %s26, %s33
    %p139 = scmp.eq.s32.totalorder %s138, 0
    %s141 = sadd.s32 %s140, 1
    %s142 = scalar_select %p139, %s140, %s141
    %p145 = pneg %p139
    %p146 = scmp.eq.s32.totalorder %s26, 1
    %p147 = por %p145, %p146
    %p148 = scmp.ne.s32.totalorder %s140, %s143
    %p149 = scmp.eq.s32.totalorder %s26, 0
    %p150 = por %p148, %p149
    %p151 = scmp.ne.s32.totalorder %s140, %s143
    %p152 = scmp.eq.s32.totalorder %s31, 1
    %p153 = por %p151, %p152
    %p154 = scmp.ne.s32.totalorder %s143, %s144
    %p155 = scmp.eq.s32.totalorder %s31, 0
    %p156 = por %p154, %p155
    %p157 = scmp.ne.s32.totalorder %s143, %s144
    %p158 = scmp.eq.s32.totalorder %s32, 1
    %p159 = por %p157, %p158
    %p161 = scmp.ne.s32.totalorder %s144, %s160
    %p162 = scmp.eq.s32.totalorder %s32, 0
    %p163 = por %p161, %p162
    %s164 = ssub.s32 %s26, %s33
    %p165 = scmp.eq.s32.totalorder %s164, 0
    %s167 = sadd.s32 %s166, 1
    %s168 = scalar_select %p165, %s166, %s167
    %p171 = pneg %p165
    %p172 = scmp.eq.s32.totalorder %s26, 1
    %p173 = por %p171, %p172
    %p174 = scmp.ne.s32.totalorder %s166, %s169
    %p175 = scmp.eq.s32.totalorder %s26, 0
    %p176 = por %p174, %p175
    %p177 = scmp.ne.s32.totalorder %s166, %s169
    %p178 = scmp.eq.s32.totalorder %s31, 1
    %p179 = por %p177, %p178
    %p180 = scmp.ne.s32.totalorder %s169, %s170
    %p181 = scmp.eq.s32.totalorder %s31, 0
    %p182 = por %p180, %p181
    %p183 = scmp.ne.s32.totalorder %s169, %s170
    %p184 = scmp.eq.s32.totalorder %s32, 1
    %p185 = por %p183, %p184
    %p187 = scmp.ne.s32.totalorder %s170, %s186
    %p188 = scmp.eq.s32.totalorder %s32, 0
    %p189 = por %p187, %p188
    %s190 = ssub.s32 %s26, %s33
    %p191 = scmp.eq.s32.totalorder %s190, 0
    %s193 = sadd.s32 %s192, 1
    %s194 = scalar_select %p191, %s192, %s193
    %p197 = pneg %p191
    %p198 = scmp.eq.s32.totalorder %s26, 1
    %p199 = por %p197, %p198
    %p200 = scmp.ne.s32.totalorder %s192, %s195
    %p201 = scmp.eq.s32.totalorder %s26, 0
    %p202 = por %p200, %p201
    %p203 = scmp.ne.s32.totalorder %s192, %s195
    %p204 = scmp.eq.s32.totalorder %s31, 1
    %p205 = por %p203, %p204
    %p206 = scmp.ne.s32.totalorder %s195, %s196
    %p207 = scmp.eq.s32.totalorder %s31, 0
    %p208 = por %p206, %p207
    %p209 = scmp.ne.s32.totalorder %s195, %s196
    %p210 = scmp.eq.s32.totalorder %s32, 1
    %p211 = por %p209, %p210
    %p213 = scmp.ne.s32.totalorder %s196, %s212
    %p214 = scmp.eq.s32.totalorder %s32, 0
    %p215 = por %p213, %p214
    %s217 = sadd.s32 %s216, 1
    %p220 = scmp.eq.s32.totalorder %s26, 1
    %p221 = scmp.ne.s32.totalorder %s216, %s218
    %p222 = scmp.eq.s32.totalorder %s26, 0
    %p223 = por %p221, %p222
    %p224 = scmp.ne.s32.totalorder %s216, %s218
    %p225 = scmp.eq.s32.totalorder %s31, 1
    %p226 = por %p224, %p225
    %p227 = scmp.ne.s32.totalorder %s218, %s219
    %p228 = scmp.eq.s32.totalorder %s31, 0
    %p229 = por %p227, %p228
    %p230 = scmp.ne.s32.totalorder %s218, %s219
    %p231 = scmp.eq.s32.totalorder %s32, 1
    %p232 = por %p230, %p231
    %p234 = scmp.ne.s32.totalorder %s219, %s233
    %p235 = scmp.eq.s32.totalorder %s32, 0
    %p236 = por %p234, %p235
    %s238 = sadd.s32 %s237, 1
    %p241 = scmp.eq.s32.totalorder %s26, 1
    %p242 = scmp.ne.s32.totalorder %s237, %s239
    %p243 = scmp.eq.s32.totalorder %s26, 0
    %p244 = por %p242, %p243
    %p245 = scmp.ne.s32.totalorder %s237, %s239
    %p246 = scmp.eq.s32.totalorder %s31, 1
    %p247 = por %p245, %p246
    %p248 = scmp.ne.s32.totalorder %s239, %s240
    %p249 = scmp.eq.s32.totalorder %s31, 0
    %p250 = por %p248, %p249
    %p251 = scmp.ne.s32.totalorder %s239, %s240
    %p252 = scmp.eq.s32.totalorder %s32, 1
    %p253 = por %p251, %p252
    %p255 = scmp.ne.s32.totalorder %s240, %s254
    %p256 = scmp.eq.s32.totalorder %s32, 0
    %p257 = por %p255, %p256
    %s259 = sadd.s32 %s258, 1
    %p262 = scmp.eq.s32.totalorder %s26, 1
    %p263 = scmp.ne.s32.totalorder %s258, %s260
    %p264 = scmp.eq.s32.totalorder %s26, 0
    %p265 = por %p263, %p264
    %p266 = scmp.ne.s32.totalorder %s258, %s260
    %p267 = scmp.eq.s32.totalorder %s31, 1
    %p268 = por %p266, %p267
    %p269 = scmp.ne.s32.totalorder %s260, %s261
    %p270 = scmp.eq.s32.totalorder %s31, 0
    %p271 = por %p269, %p270
    %p272 = scmp.ne.s32.totalorder %s260, %s261
    %p273 = scmp.eq.s32.totalorder %s32, 1
    %p274 = por %p272, %p273
    %p276 = scmp.ne.s32.totalorder %s261, %s275
    %p277 = scmp.eq.s32.totalorder %s32, 0
    %p278 = por %p276, %p277
    %s280 = sadd.s32 %s279, 1
    %p283 = scmp.eq.s32.totalorder %s26, 1
    %p284 = scmp.ne.s32.totalorder %s279, %s281
    %p285 = scmp.eq.s32.totalorder %s26, 0
    %p286 = por %p284, %p285
    %p287 = scmp.ne.s32.totalorder %s279, %s281
    %p288 = scmp.eq.s32.totalorder %s31, 1
    %p289 = por %p287, %p288
    %p290 = scmp.ne.s32.totalorder %s281, %s282
    %p291 = scmp.eq.s32.totalorder %s31, 0
    %p292 = por %p290, %p291
    %p293 = scmp.ne.s32.totalorder %s281, %s282
    %p294 = scmp.eq.s32.totalorder %s32, 1
    %p295 = por %p293, %p294
    %p297 = scmp.ne.s32.totalorder %s282, %s296
    %p298 = scmp.eq.s32.totalorder %s32, 0
    %p299 = por %p297, %p298
    %s301 = sadd.s32 %s300, 1
    %p304 = scmp.eq.s32.totalorder %s26, 1
    %p305 = scmp.ne.s32.totalorder %s300, %s302
    %p306 = scmp.eq.s32.totalorder %s26, 0
    %p307 = por %p305, %p306
    %p308 = scmp.ne.s32.totalorder %s300, %s302
    %p309 = scmp.eq.s32.totalorder %s31, 1
    %p310 = por %p308, %p309
    %p311 = scmp.ne.s32.totalorder %s302, %s303
    %p312 = scmp.eq.s32.totalorder %s31, 0
    %p313 = por %p311, %p312
    %p314 = scmp.ne.s32.totalorder %s302, %s303
    %p315 = scmp.eq.s32.totalorder %s32, 1
    %p316 = por %p314, %p315
    %p318 = scmp.ne.s32.totalorder %s303, %s317
    %p319 = scmp.eq.s32.totalorder %s32, 0
    %p320 = por %p318, %p319
    %s322 = sadd.s32 %s321, 1
    %p325 = scmp.eq.s32.totalorder %s26, 1
    %p326 = scmp.ne.s32.totalorder %s321, %s323
    %p327 = scmp.eq.s32.totalorder %s26, 0
    %p328 = por %p326, %p327
    %p329 = scmp.ne.s32.totalorder %s321, %s323
    %p330 = scmp.eq.s32.totalorder %s31, 1
    %p331 = por %p329, %p330
    %p332 = scmp.ne.s32.totalorder %s323, %s324
    %p333 = scmp.eq.s32.totalorder %s31, 0
    %p334 = por %p332, %p333
    %p335 = scmp.ne.s32.totalorder %s323, %s324
    %p336 = scmp.eq.s32.totalorder %s32, 1
    %p337 = por %p335, %p336
    %p339 = scmp.ne.s32.totalorder %s324, %s338
    %p340 = scmp.eq.s32.totalorder %s32, 0
    %p341 = por %p339, %p340
    %s343 = sadd.s32 %s342, 1
    %p346 = scmp.eq.s32.totalorder %s26, 1
    %p347 = scmp.ne.s32.totalorder %s342, %s344
    %p348 = scmp.eq.s32.totalorder %s26, 0
    %p349 = por %p347, %p348
    %p350 = scmp.ne.s32.totalorder %s342, %s344
    %p351 = scmp.eq.s32.totalorder %s31, 1
    %p352 = por %p350, %p351
    %p353 = scmp.ne.s32.totalorder %s344, %s345
    %p354 = scmp.eq.s32.totalorder %s31, 0
    %p355 = por %p353, %p354
    %p356 = scmp.ne.s32.totalorder %s344, %s345
    %p357 = scmp.eq.s32.totalorder %s32, 1
    %p358 = por %p356, %p357
    %p360 = scmp.ne.s32.totalorder %s345, %s359
    %p361 = scmp.eq.s32.totalorder %s32, 0
    %p362 = por %p360, %p361
    %s364 = sadd.s32 %s363, 1
    %p367 = scmp.eq.s32.totalorder %s26, 1
    %p368 = scmp.ne.s32.totalorder %s363, %s365
    %p369 = scmp.eq.s32.totalorder %s26, 0
    %p370 = por %p368, %p369
    %p371 = scmp.ne.s32.totalorder %s363, %s365
    %p372 = scmp.eq.s32.totalorder %s31, 1
    %p373 = por %p371, %p372
    %p374 = scmp.ne.s32.totalorder %s365, %s366
    %p375 = scmp.eq.s32.totalorder %s31, 0
    %p376 = por %p374, %p375
    %p377 = scmp.ne.s32.totalorder %s365, %s366
    %p378 = scmp.eq.s32.totalorder %s32, 1
    %p379 = por %p377, %p378
    %p381 = scmp.ne.s32.totalorder %s366, %s380
    %p382 = scmp.eq.s32.totalorder %s32, 0
    %p383 = por %p381, %p382
    %s385 = sadd.s32 %s384, 1
    %p388 = scmp.eq.s32.totalorder %s26, 1
    %p389 = scmp.ne.s32.totalorder %s384, %s386
    %p390 = scmp.eq.s32.totalorder %s26, 0
    %p391 = por %p389, %p390
    %p392 = scmp.ne.s32.totalorder %s384, %s386
    %p393 = scmp.eq.s32.totalorder %s31, 1
    %p394 = por %p392, %p393
    %p395 = scmp.ne.s32.totalorder %s386, %s387
    %p396 = scmp.eq.s32.totalorder %s31, 0
    %p397 = por %p395, %p396
    %p398 = scmp.ne.s32.totalorder %s386, %s387
    %p399 = scmp.eq.s32.totalorder %s32, 1
    %p400 = por %p398, %p399
    %p402 = scmp.ne.s32.totalorder %s387, %s401
    %p403 = scmp.eq.s32.totalorder %s32, 0
    %p404 = por %p402, %p403
    %s406 = sadd.s32 %s405, 1
    %p409 = scmp.eq.s32.totalorder %s26, 1
    %p410 = scmp.ne.s32.totalorder %s405, %s407
    %p411 = scmp.eq.s32.totalorder %s26, 0
    %p412 = por %p410, %p411
    %p413 = scmp.ne.s32.totalorder %s405, %s407
    %p414 = scmp.eq.s32.totalorder %s31, 1
    %p415 = por %p413, %p414
    %p416 = scmp.ne.s32.totalorder %s407, %s408
    %p417 = scmp.eq.s32.totalorder %s31, 0
    %p418 = por %p416, %p417
    %p419 = scmp.ne.s32.totalorder %s407, %s408
    %p420 = scmp.eq.s32.totalorder %s32, 1
    %p421 = por %p419, %p420
    %p423 = scmp.ne.s32.totalorder %s408, %s422
    %p424 = scmp.eq.s32.totalorder %s32, 0
    %p425 = por %p423, %p424
    %s427 = sadd.s32 %s426, 1
    %p430 = scmp.eq.s32.totalorder %s26, 1
    %p431 = scmp.ne.s32.totalorder %s426, %s428
    %p432 = scmp.eq.s32.totalorder %s26, 0
    %p433 = por %p431, %p432
    %p434 = scmp.ne.s32.totalorder %s426, %s428
    %p435 = scmp.eq.s32.totalorder %s31, 1
    %p436 = por %p434, %p435
    %p437 = scmp.ne.s32.totalorder %s428, %s429
    %p438 = scmp.eq.s32.totalorder %s31, 0
    %p439 = por %p437, %p438
    %p440 = scmp.ne.s32.totalorder %s428, %s429
    %p441 = scmp.eq.s32.totalorder %s32, 1
    %p442 = por %p440, %p441
    %p444 = scmp.ne.s32.totalorder %s429, %s443
    %p445 = scmp.eq.s32.totalorder %s32, 0
    %p446 = por %p444, %p445
    %s447 = ssub.s32 %s26, %s33
    %p448 = scmp.eq.s32.totalorder %s447, 0
    %s450 = sadd.s32 %s449, 1
    %s451 = scalar_select %p448, %s449, %s450
    %p454 = pneg %p448
    %p455 = scmp.eq.s32.totalorder %s26, 1
    %p456 = por %p454, %p455
    %p457 = scmp.ne.s32.totalorder %s449, %s452
    %p458 = scmp.eq.s32.totalorder %s26, 0
    %p459 = por %p457, %p458
    %p460 = scmp.ne.s32.totalorder %s449, %s452
    %p461 = scmp.eq.s32.totalorder %s31, 1
    %p462 = por %p460, %p461
    %p463 = scmp.ne.s32.totalorder %s452, %s453
    %p464 = scmp.eq.s32.totalorder %s31, 0
    %p465 = por %p463, %p464
    %p466 = scmp.ne.s32.totalorder %s452, %s453
    %p467 = scmp.eq.s32.totalorder %s32, 1
    %p468 = por %p466, %p467
    %p470 = scmp.ne.s32.totalorder %s453, %s469
    %p471 = scmp.eq.s32.totalorder %s32, 0
    %p472 = por %p470, %p471
    %p473 = scmp.le.s32.totalorder 1, %s26
    %p474 = scmp.lt.s32.totalorder %s26, 3
    %p475 = pnand %p473, %p474
    %p476 = pneg %p475
    // Predicated region
    $region9: #{_lambda_.3} parent=5 // pred_check
      _
    $region10: #{_lambda_.3} parent=5 // pred_check_branch
      %478 = sbr.rel (%p475) target = $region12
    $region11: #{_lambda_.3} parent=5 // pred_region
      %s479 = ssub.s32 %s26, 1
      // Predicated region
      $region13: #{_lambda_.3} parent=11 // pred_check
        %p480 = pneg %p229
      $region14: #{_lambda_.3} parent=11 // pred_check_branch
        %482 = sbr.rel (%p480) target = $region16
      $region15: #{_lambda_.3} parent=11 // pred_region
        _
      $region16: #{_lambda_.3} parent=11 // pred_fallthru
        _
      // Predicated region
      $region17: #{_lambda_.3} parent=11 // pred_check
        %p483 = pneg %p250
      $region18: #{_lambda_.3} parent=11 // pred_check_branch
        %485 = sbr.rel (%p483) target = $region20
      $region19: #{_lambda_.3} parent=11 // pred_region
        _
      $region20: #{_lambda_.3} parent=11 // pred_fallthru
        _
      // Predicated region
      $region21: #{_lambda_.3} parent=11 // pred_check
        %p486 = pneg %p271
      $region22: #{_lambda_.3} parent=11 // pred_check_branch
        %488 = sbr.rel (%p486) target = $region24
      $region23: #{_lambda_.3} parent=11 // pred_region
        _
      $region24: #{_lambda_.3} parent=11 // pred_fallthru
        _
      // Predicated region
      $region25: #{_lambda_.3} parent=11 // pred_check
        %p489 = pneg %p292
      $region26: #{_lambda_.3} parent=11 // pred_check_branch
        %491 = sbr.rel (%p489) target = $region28
      $region27: #{_lambda_.3} parent=11 // pred_region
        _
      $region28: #{_lambda_.3} parent=11 // pred_fallthru
        _
      // Predicated region
      $region29: #{_lambda_.3} parent=11 // pred_check
        %p492 = pneg %p313
      $region30: #{_lambda_.3} parent=11 // pred_check_branch
        %494 = sbr.rel (%p492) target = $region32
      $region31: #{_lambda_.3} parent=11 // pred_region
        _
      $region32: #{_lambda_.3} parent=11 // pred_fallthru
        _
      // Predicated region
      $region33: #{_lambda_.3} parent=11 // pred_check
        %p495 = pneg %p334
      $region34: #{_lambda_.3} parent=11 // pred_check_branch
        %497 = sbr.rel (%p495) target = $region36
      $region35: #{_lambda_.3} parent=11 // pred_region
        _
      $region36: #{_lambda_.3} parent=11 // pred_fallthru
        _
      // Predicated region
      $region37: #{_lambda_.3} parent=11 // pred_check
        %p498 = pneg %p355
      $region38: #{_lambda_.3} parent=11 // pred_check_branch
        %500 = sbr.rel (%p498) target = $region40
      $region39: #{_lambda_.3} parent=11 // pred_region
        _
      $region40: #{_lambda_.3} parent=11 // pred_fallthru
        _
      // Predicated region
      $region41: #{_lambda_.3} parent=11 // pred_check
        %p501 = pneg %p376
      $region42: #{_lambda_.3} parent=11 // pred_check_branch
        %503 = sbr.rel (%p501) target = $region44
      $region43: #{_lambda_.3} parent=11 // pred_region
        _
      $region44: #{_lambda_.3} parent=11 // pred_fallthru
        _
      // Predicated region
      $region45: #{_lambda_.3} parent=11 // pred_check
        %p504 = pneg %p397
      $region46: #{_lambda_.3} parent=11 // pred_check_branch
        %506 = sbr.rel (%p504) target = $region48
      $region47: #{_lambda_.3} parent=11 // pred_region
        _
      $region48: #{_lambda_.3} parent=11 // pred_fallthru
        _
      // Predicated region
      $region49: #{_lambda_.3} parent=11 // pred_check
        %p507 = pneg %p418
      $region50: #{_lambda_.3} parent=11 // pred_check_branch
        %509 = sbr.rel (%p507) target = $region52
      $region51: #{_lambda_.3} parent=11 // pred_region
        _
      $region52: #{_lambda_.3} parent=11 // pred_fallthru
        _
      // Predicated region
      $region53: #{_lambda_.3} parent=11 // pred_check
        %p510 = pneg %p439
      $region54: #{_lambda_.3} parent=11 // pred_check_branch
        %512 = sbr.rel (%p510) target = $region56
      $region55: #{_lambda_.3} parent=11 // pred_region
        _
      $region56: #{_lambda_.3} parent=11 // pred_fallthru
        _
    $region12: #{_lambda_.3} parent=5 // pred_fallthru
      _
    %p513 = scmp.lt.s32.totalorder %s26, 2
    // Predicated region
    $region57: #{_lambda_.3} parent=5 // pred_check
      %p514 = pneg %p513
    $region58: #{_lambda_.3} parent=5 // pred_check_branch
      %516 = sbr.rel (%p514) target = $region60
    $region59: #{_lambda_.3} parent=5 // pred_region
      // Predicated region
      $region61: #{_lambda_.3} parent=59 // pred_check
        %p517 = pneg %p46
      $region62: #{_lambda_.3} parent=59 // pred_check_branch
        %519 = sbr.rel (%p517) target = $region64
      $region63: #{_lambda_.3} parent=59 // pred_region
        %p520 = scmp.lt.s32.totalorder %s26, 1
        %s521 = scalar_select %p520, %s26, 1
        %s522 = smul.addr %s521, 6
        %s523 = smul.addr %s522, 8
        %s524 = scalar_lea.vmem %s0, %s523
      $region64: #{_lambda_.3} parent=59 // pred_fallthru
        _
      // Predicated region
      $region65: #{_lambda_.3} parent=59 // pred_check
        %p525 = pneg %p72
      $region66: #{_lambda_.3} parent=59 // pred_check_branch
        %527 = sbr.rel (%p525) target = $region68
      $region67: #{_lambda_.3} parent=59 // pred_region
        %p528 = scmp.lt.s32.totalorder %s26, 1
        %s529 = scalar_select %p528, %s26, 1
        %s530 = smul.addr %s529, 2
        %s531 = smul.addr %s530, 8
        %s532 = scalar_lea.vmem %s1, %s531
      $region68: #{_lambda_.3} parent=59 // pred_fallthru
        _
      // Predicated region
      $region69: #{_lambda_.3} parent=59 // pred_check
        %p533 = pneg %p98
      $region70: #{_lambda_.3} parent=59 // pred_check_branch
        %535 = sbr.rel (%p533) target = $region72
      $region71: #{_lambda_.3} parent=59 // pred_region
        %p536 = scmp.lt.s32.totalorder %s26, 1
        %s537 = scalar_select %p536, %s26, 1
        %s538 = smul.addr %s537, 2
        %s539 = scalar_lea.vmem %s2, %s538
      $region72: #{_lambda_.3} parent=59 // pred_fallthru
        _
      // Predicated region
      $region73: #{_lambda_.3} parent=59 // pred_check
        %p540 = pneg %p124
      $region74: #{_lambda_.3} parent=59 // pred_check_branch
        %542 = sbr.rel (%p540) target = $region76
      $region75: #{_lambda_.3} parent=59 // pred_region
        %p543 = scmp.lt.s32.totalorder %s26, 1
        %s544 = scalar_select %p543, %s26, 1
        %s545 = scalar_lea.vmem %s3, %s544
      $region76: #{_lambda_.3} parent=59 // pred_fallthru
        _
      // Predicated region
      $region77: #{_lambda_.3} parent=59 // pred_check
        %p546 = pneg %p150
      $region78: #{_lambda_.3} parent=59 // pred_check_branch
        %548 = sbr.rel (%p546) target = $region80
      $region79: #{_lambda_.3} parent=59 // pred_region
        %p549 = scmp.lt.s32.totalorder %s26, 1
        %s550 = scalar_select %p549, %s26, 1
        %s551 = scalar_lea.vmem %s4, %s550
      $region80: #{_lambda_.3} parent=59 // pred_fallthru
        _
      // Predicated region
      $region81: #{_lambda_.3} parent=59 // pred_check
        %p552 = pneg %p176
      $region82: #{_lambda_.3} parent=59 // pred_check_branch
        %554 = sbr.rel (%p552) target = $region84
      $region83: #{_lambda_.3} parent=59 // pred_region
        %p555 = scmp.lt.s32.totalorder %s26, 1
        %s556 = scalar_select %p555, %s26, 1
        %s557 = scalar_lea.vmem %s5, %s556
      $region84: #{_lambda_.3} parent=59 // pred_fallthru
        _
      // Predicated region
      $region85: #{_lambda_.3} parent=59 // pred_check
        %p558 = pneg %p202
      $region86: #{_lambda_.3} parent=59 // pred_check_branch
        %560 = sbr.rel (%p558) target = $region88
      $region87: #{_lambda_.3} parent=59 // pred_region
        %p561 = scmp.lt.s32.totalorder %s26, 1
        %s562 = scalar_select %p561, %s26, 1
        %s563 = scalar_lea.vmem %s6, %s562
      $region88: #{_lambda_.3} parent=59 // pred_fallthru
        _
    $region60: #{_lambda_.3} parent=5 // pred_fallthru
      _
    %p564 = scmp.le.s32.totalorder 1, %s26
    %p565 = scmp.lt.s32.totalorder %s26, 3
    %p566 = pnand %p564, %p565
    %p567 = pneg %p566
    // Predicated region
    $region89: #{_lambda_.3} parent=5 // pred_check
      _
    $region90: #{_lambda_.3} parent=5 // pred_check_branch
      %569 = sbr.rel (%p566) target = $region92
    $region91: #{_lambda_.3} parent=5 // pred_region
      %s570 = ssub.s32 %s26, 1
      %p571 = scmp.lt.s32.totalorder %s31, 1
      %s572 = scalar_select %p571, %s31, 1
      %s573 = smul.addr %s572, 6
      %s574 = smul.addr %s573, 8
      %s575 = scalar_lea.vmem %s0, %s574
      %p576 = pneg %p52
      %p577 = pneg %p49
      %p578 = scmp.lt.s32.totalorder %s31, 1
      %s579 = scalar_select %p578, %s31, 1
      %s580 = smul.addr %s579, 2
      %s581 = smul.addr %s580, 8
      %s582 = scalar_lea.vmem %s1, %s581
      %p583 = pneg %p78
      %p584 = pneg %p75
      %p585 = scmp.lt.s32.totalorder %s31, 1
      %s586 = scalar_select %p585, %s31, 1
      %s587 = smul.addr %s586, 2
      %s588 = scalar_lea.vmem %s2, %s587
      %p589 = pneg %p104
      %p590 = pneg %p101
      %p591 = scmp.lt.s32.totalorder %s31, 1
      %s592 = scalar_select %p591, %s31, 1
      %s593 = scalar_lea.vmem %s3, %s592
      %p594 = pneg %p130
      %p595 = pneg %p127
      %p596 = scmp.lt.s32.totalorder %s31, 1
      %s597 = scalar_select %p596, %s31, 1
      %s598 = scalar_lea.vmem %s4, %s597
      %p599 = pneg %p156
      %p600 = pneg %p153
      %p601 = scmp.lt.s32.totalorder %s31, 1
      %s602 = scalar_select %p601, %s31, 1
      %s603 = scalar_lea.vmem %s5, %s602
      %p604 = pneg %p182
      %p605 = pneg %p179
      %p606 = scmp.lt.s32.totalorder %s31, 1
      %s607 = scalar_select %p606, %s31, 1
      %s608 = scalar_lea.vmem %s6, %s607
      %p609 = pneg %p208
      %p610 = pneg %p205
      %p611 = pneg %p229
      %p612 = pneg %p226
      %p613 = pneg %p250
      %p614 = pneg %p247
      %p615 = pneg %p271
      %p616 = pneg %p268
      %p617 = pneg %p292
      %p618 = pneg %p289
      %p619 = pneg %p313
      %p620 = pneg %p310
      %p621 = pneg %p334
      %p622 = pneg %p331
      %p623 = pneg %p355
      %p624 = pneg %p352
      %p625 = pneg %p376
      %p626 = pneg %p373
      %p627 = pneg %p397
      %p628 = pneg %p394
      %p629 = pneg %p418
      %p630 = pneg %p415
      %p631 = pneg %p439
      %p632 = pneg %p436
      %p633 = pneg %p465
      %p634 = pneg %p462
      %p635 = scmp.lt.s32.totalorder %s31, 1
      %s636 = scalar_select %p635, %s31, 1
      %s637 = smul.addr %s636, 2
      %s638 = smul.addr %s637, 4
      %s639 = scalar_lea.vmem %s18, %s638
      %p640 = scmp.lt.s32.totalorder %s31, 1
      %s641 = scalar_select %p640, %s31, 1
      %s642 = smul.addr %s641, 6
      %s643 = smul.addr %s642, 8
      %s644 = scalar_lea.vmem %s0, %s643
      %p645 = scmp.lt.s32.totalorder %s31, 1
      %s646 = scalar_select %p645, %s31, 1
      %s647 = smul.addr %s646, 2
      %s648 = smul.addr %s647, 8
      %s649 = scalar_lea.vmem %s1, %s648
      %p650 = scmp.lt.s32.totalorder %s31, 1
      %s651 = scalar_select %p650, %s31, 1
      %s652 = smul.addr %s651, 2
      %s653 = scalar_lea.vmem %s2, %s652
      %p654 = scmp.lt.s32.totalorder %s31, 1
      %s655 = scalar_select %p654, %s31, 1
      %s656 = scalar_lea.vmem %s3, %s655
      %p657 = scmp.lt.s32.totalorder %s31, 1
      %s658 = scalar_select %p657, %s31, 1
      %s659 = scalar_lea.vmem %s4, %s658
      %p660 = scmp.lt.s32.totalorder %s31, 1
      %s661 = scalar_select %p660, %s31, 1
      %s662 = scalar_lea.vmem %s5, %s661
      %p663 = scmp.lt.s32.totalorder %s31, 1
      %s664 = scalar_select %p663, %s31, 1
      %s665 = scalar_lea.vmem %s6, %s664
      %p666 = scmp.lt.s32.totalorder %s31, 1
      %s667 = scalar_select %p666, %s31, 1
      %s668 = smul.addr %s667, 2
      %s669 = smul.addr %s668, 4
      %s670 = scalar_lea.vmem %s18, %s669
      %v672 = vld [vmem:[%s644] sm:$0xff]
      %v673 = vld [vmem:[%s644 + $0x8] sm:$0xff]
      %v674 = vld [vmem:[%s644 + $0x10] sm:$0xff]
      %v675 = vld [vmem:[%s644 + $0x18] sm:$0xff]
      %v676 = vld [vmem:[%s644 + $0x20] sm:$0x3]
      %v677 = vld [vmem:[%s644 + $0x28] sm:$0x3]
      %v678 = vld [vmem:[%s649] sm:$0x1f]
      %v679 = vld [vmem:[%s649 + $0x8] sm:$0x1f]
      %v680 = vld [vmem:[%s653] sm:$0x3]
      %v681 = vld [vmem:[%s7] sm:$0xff]
      %v682 = vld [vmem:[%s7 + $0x8] sm:$0xff]
      %v683 = vld [vmem:[%s7 + $0x10] sm:$0xff]
      %v684 = vld [vmem:[%s7 + $0x18] sm:$0xff]
      %v685 = vld [vmem:[%s656] sm:$0x1]
      %v686 = vld [vmem:[%s8] sm:$0xff]
      %v687 = vld [vmem:[%s8 + $0x8] sm:$0xff]
      %v688 = vld [vmem:[%s8 + $0x10] sm:$0xff]
      %v689 = vld [vmem:[%s8 + $0x18] sm:$0xff]
      %v691 = vlaneseq
      %v692 = vshrl.u32 %v691, 7
      %v693 = vsub.s32 0, %v692
      %v694 = vrot.slane %v685, %v693
      %v696 = vmul.f32 %v681, %v694
      %v697 = vmul.f32 %v682, %v694
      %v698 = vmul.f32 %v683, %v694
      %v699 = vmul.f32 %v684, %v694
      %v700 = vpack.c.bf16 %v697, %v696
      %v701 = vpack.c.bf16 %v699, %v698
      %v702 = vpack.c.bf16 %v674, %v672
      %v703 = vpack.c.bf16 %v675, %v673
      %v704 = vpack.c.bf16 %v676, %v676
      %v705 = vpack.c.bf16 %v677, %v677
      %vm706 = vcmask 146432
      %v708 = vsel %vm706, %v700, 0
      %v711 = vsel %vm706, %v701, 0
      %vm713 = vcmask 1040384
      %v715 = vsel %vm713, %v704, 0
      %v718 = vsel %vm713, %v705, 0
      %720 = vmatprep.subr.bf16.mxu0 %v703
      %721 = vmatpush1.bf16.msra.mxu0 %v702
      %722 = vmatprep.subr.bf16.mxu0 %v718
      %723 = vmatpush1.bf16.msra.mxu0 %v715
      %724 = vmatprep.subr.bf16.mxu0 0
      %725 = vmatpush1.bf16.msra.mxu0 0
      %726 = vmatprep.subr.bf16.mxu0 0
      %727 = vmatpush1.bf16.msra.mxu0 0
      %728 = vmatprep.subr.bf16.mxu0 0
      %729 = vmatpush1.bf16.msra.mxu0 0
      %730 = vmatprep.subr.bf16.mxu0 0
      %731 = vmatpush1.bf16.msra.mxu0 0
      %732 = vmatprep.subr.bf16.mxu0 0
      %733 = vmatpush1.bf16.msra.mxu0 0
      %734 = vmatprep.subr.bf16.mxu0 0
      %735 = vmatpush1.bf16.msra.mxu0 0
      %736 = vmatprep.subr.bf16.mxu0 0
      %737 = vmatpush1.bf16.msra.mxu0 0
      %738 = vmatprep.subr.bf16.mxu0 0
      %739 = vmatpush1.bf16.msra.mxu0 0
      %740 = vmatprep.subr.bf16.mxu0 0
      %741 = vmatpush1.bf16.msra.mxu0 0
      %742 = vmatprep.subr.bf16.mxu0 0
      %743 = vmatpush1.bf16.msra.mxu0 0
      %744 = vmatprep.subr.bf16.mxu0 0
      %745 = vmatpush1.bf16.msra.mxu0 0
      %746 = vmatprep.subr.bf16.mxu0 0
      %747 = vmatpush1.bf16.msra.mxu0 0
      %748 = vmatprep.subr.bf16.mxu0 0
      %749 = vmatpush1.bf16.msra.mxu0 0
      %750 = vmatprep.subr.bf16.mxu0 0
      %751 = vmatpush1.bf16.msra.mxu0 0
      %752 = vmatprep.mubr.bf16.mxu0 0
      %753 = vmatmul.mubr.bf16.gmra.mrb[0].mxu0 %v708
      %v754 = vpop.f32.mrb[0].mxu0
      %v755 = vadd.f32 0.0, %v754
      %v756 = vpop.f32.mrb[0].mxu0
      %v757 = vadd.f32 0.0, %v756
      %v758 = vpop.f32.mrb[0].mxu0
      %v759 = vadd.f32 0.0, %v758
      %v760 = vpop.f32.mrb[0].mxu0
      %v761 = vadd.f32 0.0, %v760
      %762 = vmatprep.mubr.bf16.mxu0 0
      %763 = vmatmul.mubr.bf16.gmra.mrb[0].mxu0 %v711
      %v764 = vpop.f32.mrb[0].mxu0
      %v765 = vadd.f32 0.0, %v764
      %v766 = vpop.f32.mrb[0].mxu0
      %v767 = vadd.f32 0.0, %v766
      %v768 = vpop.f32.mrb[0].mxu0
      %v769 = vadd.f32 0.0, %v768
      %v770 = vpop.f32.mrb[0].mxu0
      %v771 = vadd.f32 0.0, %v770
      %772 = vdwg.mxu0
      %v773 = vmul.f32 %v696, %v696
      %v774 = vmul.f32 %v697, %v697
      %v775 = vmul.f32 %v698, %v698
      %v776 = vmul.f32 %v699, %v699
      %v777 = vsel %vm706, %v773, 0.0
      %778 = vadd.xlane.f32.xlu0 %v777
      %v779 = vpop.xlane.xlu0 %778
      %v780 = vsel %vm706, %v774, 0.0
      %781 = vadd.xlane.f32.xlu0 %v780
      %v782 = vpop.xlane.xlu0 %781
      %v783 = vsel %vm706, %v775, 0.0
      %784 = vadd.xlane.f32.xlu0 %v783
      %v785 = vpop.xlane.xlu0 %784
      %v786 = vsel %vm706, %v776, 0.0
      %787 = vadd.xlane.f32.xlu0 %v786
      %v788 = vpop.xlane.xlu0 %787
      %v789 = vadd.f32 %v779, 1e-08
      %v790 = vadd.f32 %v782, 1e-08
      %v791 = vadd.f32 %v785, 1e-08
      %v792 = vadd.f32 %v788, 1e-08
      %v793 = vrsqrt.pop %v789
      %v794 = vrsqrt.pop %v790
      %v795 = vrsqrt.pop %v791
      %v796 = vrsqrt.pop %v792
      %v797 = vmul.f32 %v755, %v793
      %v798 = vmul.f32 %v757, %v793
      %v799 = vmul.f32 %v759, %v794
      %v800 = vmul.f32 %v761, %v794
      %v801 = vmul.f32 %v765, %v795
      %v802 = vmul.f32 %v767, %v795
      %v803 = vmul.f32 %v769, %v796
      %v804 = vmul.f32 %v771, %v796
      %806 = vset.pattern.permute.xlu0 0
      %807 = vperm.xlu0 %806, %v686
      %v808 = vpop.permute.xlu0 %807
      %811 = vset.pattern.permute.xlu0 0
      %812 = vperm.xlu0 %811, %v687
      %v813 = vpop.permute.xlu0 %812
      %816 = vset.pattern.permute.xlu0 0
      %817 = vperm.xlu0 %816, %v688
      %v818 = vpop.permute.xlu0 %817
      %821 = vset.pattern.permute.xlu0 0
      %822 = vperm.xlu0 %821, %v689
      %v823 = vpop.permute.xlu0 %822
      %v825 = vadd.f32 %v797, %v808
      %v826 = vadd.f32 %v798, %v808
      %v827 = vadd.f32 %v799, %v813
      %v828 = vadd.f32 %v800, %v813
      %v829 = vadd.f32 %v801, %v818
      %v830 = vadd.f32 %v802, %v818
      %v831 = vadd.f32 %v803, %v823
      %v832 = vadd.f32 %v804, %v823
      %vm833 = vcmp.ge.f32.partialorder %v825, 0.0
      %vm834 = vcmp.ge.f32.partialorder %v826, 0.0
      %vm835 = vcmp.ge.f32.partialorder %v827, 0.0
      %vm836 = vcmp.ge.f32.partialorder %v828, 0.0
      %vm837 = vcmp.ge.f32.partialorder %v829, 0.0
      %vm838 = vcmp.ge.f32.partialorder %v830, 0.0
      %vm839 = vcmp.ge.f32.partialorder %v831, 0.0
      %vm840 = vcmp.ge.f32.partialorder %v832, 0.0
      %v841 = vmul.f32 %v825, 0.2
      %v842 = vmul.f32 %v826, 0.2
      %v843 = vmul.f32 %v827, 0.2
      %v844 = vmul.f32 %v828, 0.2
      %v845 = vmul.f32 %v829, 0.2
      %v846 = vmul.f32 %v830, 0.2
      %v847 = vmul.f32 %v831, 0.2
      %v848 = vmul.f32 %v832, 0.2
      %v849 = vsel %vm833, %v825, %v841
      %v850 = vsel %vm834, %v826, %v842
      %v851 = vsel %vm835, %v827, %v843
      %v852 = vsel %vm836, %v828, %v844
      %v853 = vsel %vm837, %v829, %v845
      %v854 = vsel %vm838, %v830, %v846
      %v855 = vsel %vm839, %v831, %v847
      %v856 = vsel %vm840, %v832, %v848
      %v857 = vmul.f32 %v849, 1.4142135
      %v858 = vmul.f32 %v850, 1.4142135
      %v859 = vmul.f32 %v851, 1.4142135
      %v860 = vmul.f32 %v852, 1.4142135
      %v861 = vmul.f32 %v853, 1.4142135
      %v862 = vmul.f32 %v854, 1.4142135
      %v863 = vmul.f32 %v855, 1.4142135
      %v864 = vmul.f32 %v856, 1.4142135
      %v865 = vld [vmem:[#allocation2] sm:$0x1]
      %867 = vset.pattern.permute.xlu0 0
      %868 = vperm.xlu0 %867, %v865
      %v869 = vpop.permute.xlu0 %868
      %v871 = vlaneseq
      %v872 = vshrl.u32 %v871, 7
      %v873 = vsub.s32 0, %v872
      %v874 = vrot.slane %v869, %v873
      %v875 = vmul.f32 %v874, %v680
      %v877 = vlaneseq
      %v878 = vshrl.u32 %v877, 7
      %v879 = vsub.s32 0, %v878
      %v880 = vrot.slane %v875, %v879
      %v881 = vlaneseq
      %v882 = vshrl.u32 %v881, 7
      %v883 = vsub.s32 1, %v882
      %v884 = vrot.slane %v875, %v883
      %v887 = vadd.f32 %v857, %v880
      %v888 = vadd.f32 %v858, %v884
      %v889 = vadd.f32 %v859, %v880
      %v890 = vadd.f32 %v860, %v884
      %v891 = vadd.f32 %v861, %v880
      %v892 = vadd.f32 %v862, %v884
      %v893 = vadd.f32 %v863, %v880
      %v894 = vadd.f32 %v864, %v884
      %v895 = vld [vmem:[%s9] sm:$0x7]
      %v896 = vld [vmem:[%s659] sm:$0x1]
      %v897 = vld [vmem:[%s10] sm:$0x7]
      %v899 = vlaneseq
      %v900 = vshrl.u32 %v899, 7
      %v901 = vsub.s32 0, %v900
      %v902 = vrot.slane %v896, %v901
      %v904 = vmul.f32 %v895, %v902
      %v905 = vpack.c.bf16 %v904, %v904
      %v906 = vpack.c.bf16 %v889, %v887
      %v907 = vpack.c.bf16 %v890, %v888
      %v908 = vpack.c.bf16 %v893, %v891
      %v909 = vpack.c.bf16 %v894, %v892
      %911 = vset.pattern.permute.xlu0 0
      %912 = vperm.xlu0 %911, %v897
      %v913 = vpop.permute.xlu0 %912
      %vm915 = vcmask 261120
      %v917 = vsel %vm915, %v905, 0
      %919 = vmatprep.subr.bf16.mxu0 %v907
      %920 = vmatpush1.bf16.msra.mxu0 %v906
      %921 = vmatprep.subr.bf16.mxu0 %v909
      %922 = vmatpush1.bf16.msra.mxu0 %v908
      %923 = vmatprep.subr.bf16.mxu0 0
      %924 = vmatpush1.bf16.msra.mxu0 0
      %925 = vmatprep.subr.bf16.mxu0 0
      %926 = vmatpush1.bf16.msra.mxu0 0
      %927 = vmatprep.subr.bf16.mxu0 0
      %928 = vmatpush1.bf16.msra.mxu0 0
      %929 = vmatprep.subr.bf16.mxu0 0
      %930 = vmatpush1.bf16.msra.mxu0 0
      %931 = vmatprep.subr.bf16.mxu0 0
      %932 = vmatpush1.bf16.msra.mxu0 0
      %933 = vmatprep.subr.bf16.mxu0 0
      %934 = vmatpush1.bf16.msra.mxu0 0
      %935 = vmatprep.subr.bf16.mxu0 0
      %936 = vmatpush1.bf16.msra.mxu0 0
      %937 = vmatprep.subr.bf16.mxu0 0
      %938 = vmatpush1.bf16.msra.mxu0 0
      %939 = vmatprep.subr.bf16.mxu0 0
      %940 = vmatpush1.bf16.msra.mxu0 0
      %941 = vmatprep.subr.bf16.mxu0 0
      %942 = vmatpush1.bf16.msra.mxu0 0
      %943 = vmatprep.subr.bf16.mxu0 0
      %944 = vmatpush1.bf16.msra.mxu0 0
      %945 = vmatprep.subr.bf16.mxu0 0
      %946 = vmatpush1.bf16.msra.mxu0 0
      %947 = vmatprep.subr.bf16.mxu0 0
      %948 = vmatpush1.bf16.msra.mxu0 0
      %949 = vmatprep.subr.bf16.mxu0 0
      %950 = vmatpush1.bf16.msra.mxu0 0
      %951 = vmatprep.mubr.bf16.mxu0 0
      %952 = vmatmul.mubr.bf16.gmra.mrb[0].mxu0 %v917
      %v953 = vpop.f32.mrb[0].mxu0
      %v954 = vadd.f32 %v913, %v953
      %v955 = vpop.f32.mrb[0].mxu0
      %v956 = vadd.f32 %v913, %v955
      %v957 = vpop.f32.mrb[0].mxu0
      %v958 = vpop.f32.mrb[0].mxu0
      %959 = vdwg.mxu0
      %v960 = vld [vmem:[%s11] sm:$0x7]
      %v961 = vpack.c.bf16 %v960, %v960
      %v962 = vpack.c.bf16 %v678, %v678
      %v963 = vpack.c.bf16 %v679, %v679
      %v964 = vld [vmem:[%s12] sm:$0x7]
      %966 = vset.pattern.permute.xlu0 0
      %967 = vperm.xlu0 %966, %v964
      %v968 = vpop.permute.xlu0 %967
      %vm970 = vcmask 39936
      %v972 = vsel %vm970, %v961, 0
      %vm974 = vcmask 1041408
      %vm975 = vcmask 1042432
      %v976 = vsel %vm974, 4294967295, 65535
      %v977 = vsel %vm975, %v976, 0
      %v979 = vand.u32 %v962, %v977
      %v982 = vand.u32 %v963, %v977
      %984 = vmatprep.subr.bf16.mxu0 %v982
      %985 = vmatpush1.bf16.msra.mxu0 %v979
      %986 = vmatprep.subr.bf16.mxu0 0
      %987 = vmatpush1.bf16.msra.mxu0 0
      %988 = vmatprep.subr.bf16.mxu0 0
      %989 = vmatpush1.bf16.msra.mxu0 0
      %990 = vmatprep.subr.bf16.mxu0 0
      %991 = vmatpush1.bf16.msra.mxu0 0
      %992 = vmatprep.subr.bf16.mxu0 0
      %993 = vmatpush1.bf16.msra.mxu0 0
      %994 = vmatprep.subr.bf16.mxu0 0
      %995 = vmatpush1.bf16.msra.mxu0 0
      %996 = vmatprep.subr.bf16.mxu0 0
      %997 = vmatpush1.bf16.msra.mxu0 0
      %998 = vmatprep.subr.bf16.mxu0 0
      %999 = vmatpush1.bf16.msra.mxu0 0
      %1000 = vmatprep.subr.bf16.mxu0 0
      %1001 = vmatpush1.bf16.msra.mxu0 0
      %1002 = vmatprep.subr.bf16.mxu0 0
      %1003 = vmatpush1.bf16.msra.mxu0 0
      %1004 = vmatprep.subr.bf16.mxu0 0
      %1005 = vmatpush1.bf16.msra.mxu0 0
      %1006 = vmatprep.subr.bf16.mxu0 0
      %1007 = vmatpush1.bf16.msra.mxu0 0
      %1008 = vmatprep.subr.bf16.mxu0 0
      %1009 = vmatpush1.bf16.msra.mxu0 0
      %1010 = vmatprep.subr.bf16.mxu0 0
      %1011 = vmatpush1.bf16.msra.mxu0 0
      %1012 = vmatprep.subr.bf16.mxu0 0
      %1013 = vmatpush1.bf16.msra.mxu0 0
      %1014 = vmatprep.subr.bf16.mxu0 0
      %1015 = vmatpush1.bf16.msra.mxu0 0
      %1016 = vmatprep.mubr.bf16.mxu0 0
      %1017 = vmatmul.mubr.bf16.gmra.mrb[0].mxu0 %v972
      %v1018 = vpop.f32.mrb[0].mxu0
      %v1019 = vadd.f32 %v968, %v1018
      %v1020 = vpop.f32.mrb[0].mxu0
      %v1021 = vadd.f32 %v968, %v1020
      %v1022 = vpop.f32.mrb[0].mxu0
      %v1023 = vpop.f32.mrb[0].mxu0
      %1024 = vdwg.mxu0
      %v1025 = vadd.f32 %v1019, %v954
      %v1026 = vadd.f32 %v1021, %v956
      %v1027 = vld [vmem:[%s13] sm:$0xff]
      %v1028 = vld [vmem:[%s13 + $0x8] sm:$0xff]
      %v1029 = vld [vmem:[%s13 + $0x10] sm:$0xff]
      %v1030 = vld [vmem:[%s13 + $0x18] sm:$0xff]
      %v1031 = vld [vmem:[%s662] sm:$0x1]
      %v1032 = vld [vmem:[%s14] sm:$0xff]
      %v1033 = vld [vmem:[%s14 + $0x8] sm:$0xff]
      %v1034 = vld [vmem:[%s14 + $0x10] sm:$0xff]
      %v1035 = vld [vmem:[%s14 + $0x18] sm:$0xff]
      %v1037 = vlaneseq
      %v1038 = vshrl.u32 %v1037, 7
      %v1039 = vsub.s32 0, %v1038
      %v1040 = vrot.slane %v1031, %v1039
      %v1042 = vmul.f32 %v1027, %v1040
      %v1043 = vmul.f32 %v1028, %v1040
      %v1044 = vmul.f32 %v1029, %v1040
      %v1045 = vmul.f32 %v1030, %v1040
      %v1046 = vpack.c.bf16 %v1043, %v1042
      %v1047 = vpack.c.bf16 %v1045, %v1044
      %v1049 = vsel %vm915, %v1046, 0
      %v1052 = vsel %vm915, %v1047, 0
      %1054 = vmatprep.subr.bf16.mxu0 %v907
      %1055 = vmatpush1.bf16.msra.mxu0 %v906
      %1056 = vmatprep.subr.bf16.mxu0 %v909
      %1057 = vmatpush1.bf16.msra.mxu0 %v908
      %1058 = vmatprep.subr.bf16.mxu0 0
      %1059 = vmatpush1.bf16.msra.mxu0 0
      %1060 = vmatprep.subr.bf16.mxu0 0
      %1061 = vmatpush1.bf16.msra.mxu0 0
      %1062 = vmatprep.subr.bf16.mxu0 0
      %1063 = vmatpush1.bf16.msra.mxu0 0
      %1064 = vmatprep.subr.bf16.mxu0 0
      %1065 = vmatpush1.bf16.msra.mxu0 0
      %1066 = vmatprep.subr.bf16.mxu0 0
      %1067 = vmatpush1.bf16.msra.mxu0 0
      %1068 = vmatprep.subr.bf16.mxu0 0
      %1069 = vmatpush1.bf16.msra.mxu0 0
      %1070 = vmatprep.subr.bf16.mxu0 0
      %1071 = vmatpush1.bf16.msra.mxu0 0
      %1072 = vmatprep.subr.bf16.mxu0 0
      %1073 = vmatpush1.bf16.msra.mxu0 0
      %1074 = vmatprep.subr.bf16.mxu0 0
      %1075 = vmatpush1.bf16.msra.mxu0 0
      %1076 = vmatprep.subr.bf16.mxu0 0
      %1077 = vmatpush1.bf16.msra.mxu0 0
      %1078 = vmatprep.subr.bf16.mxu0 0
      %1079 = vmatpush1.bf16.msra.mxu0 0
      %1080 = vmatprep.subr.bf16.mxu0 0
      %1081 = vmatpush1.bf16.msra.mxu0 0
      %1082 = vmatprep.subr.bf16.mxu0 0
      %1083 = vmatpush1.bf16.msra.mxu0 0
      %1084 = vmatprep.subr.bf16.mxu0 0
      %1085 = vmatpush1.bf16.msra.mxu0 0
      %1086 = vmatprep.mubr.bf16.mxu0 0
      %1087 = vmatmul.mubr.bf16.gmra.mrb[0].mxu0 %v1049
      %v1088 = vpop.f32.mrb[0].mxu0
      %v1089 = vadd.f32 0.0, %v1088
      %v1090 = vpop.f32.mrb[0].mxu0
      %v1091 = vadd.f32 0.0, %v1090
      %v1092 = vpop.f32.mrb[0].mxu0
      %v1093 = vadd.f32 0.0, %v1092
      %v1094 = vpop.f32.mrb[0].mxu0
      %v1095 = vadd.f32 0.0, %v1094
      %1096 = vmatprep.mubr.bf16.mxu0 0
      %1097 = vmatmul.mubr.bf16.gmra.mrb[0].mxu0 %v1052
      %v1098 = vpop.f32.mrb[0].mxu0
      %v1099 = vadd.f32 0.0, %v1098
      %v1100 = vpop.f32.mrb[0].mxu0
      %v1101 = vadd.f32 0.0, %v1100
      %v1102 = vpop.f32.mrb[0].mxu0
      %v1103 = vadd.f32 0.0, %v1102
      %v1104 = vpop.f32.mrb[0].mxu0
      %v1105 = vadd.f32 0.0, %v1104
      %1106 = vdwg.mxu0
      %v1107 = vmul.f32 %v1042, %v1042
      %v1108 = vmul.f32 %v1043, %v1043
      %v1109 = vmul.f32 %v1044, %v1044
      %v1110 = vmul.f32 %v1045, %v1045
      %v1111 = vsel %vm915, %v1107, 0.0
      %1112 = vadd.xlane.f32.xlu0 %v1111
      %v1113 = vpop.xlane.xlu0 %1112
      %v1114 = vsel %vm915, %v1108, 0.0
      %1115 = vadd.xlane.f32.xlu0 %v1114
      %v1116 = vpop.xlane.xlu0 %1115
      %v1117 = vsel %vm915, %v1109, 0.0
      %1118 = vadd.xlane.f32.xlu0 %v1117
      %v1119 = vpop.xlane.xlu0 %1118
      %v1120 = vsel %vm915, %v1110, 0.0
      %1121 = vadd.xlane.f32.xlu0 %v1120
      %v1122 = vpop.xlane.xlu0 %1121
      %v1123 = vadd.f32 %v1113, 1e-08
      %v1124 = vadd.f32 %v1116, 1e-08
      %v1125 = vadd.f32 %v1119, 1e-08
      %v1126 = vadd.f32 %v1122, 1e-08
      %v1127 = vrsqrt.pop %v1123
      %v1128 = vrsqrt.pop %v1124
      %v1129 = vrsqrt.pop %v1125
      %v1130 = vrsqrt.pop %v1126
      %v1131 = vmul.f32 %v1089, %v1127
      %v1132 = vmul.f32 %v1091, %v1127
      %v1133 = vmul.f32 %v1093, %v1128
      %v1134 = vmul.f32 %v1095, %v1128
      %v1135 = vmul.f32 %v1099, %v1129
      %v1136 = vmul.f32 %v1101, %v1129
      %v1137 = vmul.f32 %v1103, %v1130
      %v1138 = vmul.f32 %v1105, %v1130
      %1140 = vset.pattern.permute.xlu0 0
      %1141 = vperm.xlu0 %1140, %v1032
      %v1142 = vpop.permute.xlu0 %1141
      %1145 = vset.pattern.permute.xlu0 0
      %1146 = vperm.xlu0 %1145, %v1033
      %v1147 = vpop.permute.xlu0 %1146
      %1150 = vset.pattern.permute.xlu0 0
      %1151 = vperm.xlu0 %1150, %v1034
      %v1152 = vpop.permute.xlu0 %1151
      %1155 = vset.pattern.permute.xlu0 0
      %1156 = vperm.xlu0 %1155, %v1035
      %v1157 = vpop.permute.xlu0 %1156
      %v1159 = vadd.f32 %v1131, %v1142
      %v1160 = vadd.f32 %v1132, %v1142
      %v1161 = vadd.f32 %v1133, %v1147
      %v1162 = vadd.f32 %v1134, %v1147
      %v1163 = vadd.f32 %v1135, %v1152
      %v1164 = vadd.f32 %v1136, %v1152
      %v1165 = vadd.f32 %v1137, %v1157
      %v1166 = vadd.f32 %v1138, %v1157
      %vm1167 = vcmp.ge.f32.partialorder %v1159, 0.0
      %vm1168 = vcmp.ge.f32.partialorder %v1160, 0.0
      %vm1169 = vcmp.ge.f32.partialorder %v1161, 0.0
      %vm1170 = vcmp.ge.f32.partialorder %v1162, 0.0
      %vm1171 = vcmp.ge.f32.partialorder %v1163, 0.0
      %vm1172 = vcmp.ge.f32.partialorder %v1164, 0.0
      %vm1173 = vcmp.ge.f32.partialorder %v1165, 0.0
      %vm1174 = vcmp.ge.f32.partialorder %v1166, 0.0
      %v1175 = vmul.f32 %v1159, 0.2
      %v1176 = vmul.f32 %v1160, 0.2
      %v1177 = vmul.f32 %v1161, 0.2
      %v1178 = vmul.f32 %v1162, 0.2
      %v1179 = vmul.f32 %v1163, 0.2
      %v1180 = vmul.f32 %v1164, 0.2
      %v1181 = vmul.f32 %v1165, 0.2
      %v1182 = vmul.f32 %v1166, 0.2
      %v1183 = vsel %vm1167, %v1159, %v1175
      %v1184 = vsel %vm1168, %v1160, %v1176
      %v1185 = vsel %vm1169, %v1161, %v1177
      %v1186 = vsel %vm1170, %v1162, %v1178
      %v1187 = vsel %vm1171, %v1163, %v1179
      %v1188 = vsel %vm1172, %v1164, %v1180
      %v1189 = vsel %vm1173, %v1165, %v1181
      %v1190 = vsel %vm1174, %v1166, %v1182
      %v1191 = vmul.f32 %v1183, 1.4142135
      %v1192 = vmul.f32 %v1184, 1.4142135
      %v1193 = vmul.f32 %v1185, 1.4142135
      %v1194 = vmul.f32 %v1186, 1.4142135
      %v1195 = vmul.f32 %v1187, 1.4142135
      %v1196 = vmul.f32 %v1188, 1.4142135
      %v1197 = vmul.f32 %v1189, 1.4142135
      %v1198 = vmul.f32 %v1190, 1.4142135
      %v1199 = vld [vmem:[%s15] sm:$0x7]
      %v1200 = vld [vmem:[%s665] sm:$0x1]
      %v1201 = vld [vmem:[%s16] sm:$0x7]
      %v1203 = vlaneseq
      %v1204 = vshrl.u32 %v1203, 7
      %v1205 = vsub.s32 0, %v1204
      %v1206 = vrot.slane %v1200, %v1205
      %v1208 = vmul.f32 %v1199, %v1206
      %v1209 = vpack.c.bf16 %v1208, %v1208
      %v1210 = vpack.c.bf16 %v1193, %v1191
      %v1211 = vpack.c.bf16 %v1194, %v1192
      %v1212 = vpack.c.bf16 %v1197, %v1195
      %v1213 = vpack.c.bf16 %v1198, %v1196
      %1215 = vset.pattern.permute.xlu0 0
      %1216 = vperm.xlu0 %1215, %v1201
      %v1217 = vpop.permute.xlu0 %1216
      %v1220 = vsel %vm915, %v1209, 0
      %1222 = vmatprep.subr.bf16.mxu0 %v1211
      %1223 = vmatpush1.bf16.msra.mxu0 %v1210
      %1224 = vmatprep.subr.bf16.mxu0 %v1213
      %1225 = vmatpush1.bf16.msra.mxu0 %v1212
      %1226 = vmatprep.subr.bf16.mxu0 0
      %1227 = vmatpush1.bf16.msra.mxu0 0
      %1228 = vmatprep.subr.bf16.mxu0 0
      %1229 = vmatpush1.bf16.msra.mxu0 0
      %1230 = vmatprep.subr.bf16.mxu0 0
      %1231 = vmatpush1.bf16.msra.mxu0 0
      %1232 = vmatprep.subr.bf16.mxu0 0
      %1233 = vmatpush1.bf16.msra.mxu0 0
      %1234 = vmatprep.subr.bf16.mxu0 0
      %1235 = vmatpush1.bf16.msra.mxu0 0
      %1236 = vmatprep.subr.bf16.mxu0 0
      %1237 = vmatpush1.bf16.msra.mxu0 0
      %1238 = vmatprep.subr.bf16.mxu0 0
      %1239 = vmatpush1.bf16.msra.mxu0 0
      %1240 = vmatprep.subr.bf16.mxu0 0
      %1241 = vmatpush1.bf16.msra.mxu0 0
      %1242 = vmatprep.subr.bf16.mxu0 0
      %1243 = vmatpush1.bf16.msra.mxu0 0
      %1244 = vmatprep.subr.bf16.mxu0 0
      %1245 = vmatpush1.bf16.msra.mxu0 0
      %1246 = vmatprep.subr.bf16.mxu0 0
      %1247 = vmatpush1.bf16.msra.mxu0 0
      %1248 = vmatprep.subr.bf16.mxu0 0
      %1249 = vmatpush1.bf16.msra.mxu0 0
      %1250 = vmatprep.subr.bf16.mxu0 0
      %1251 = vmatpush1.bf16.msra.mxu0 0
      %1252 = vmatprep.subr.bf16.mxu0 0
      %1253 = vmatpush1.bf16.msra.mxu0 0
      %1254 = vmatprep.mubr.bf16.mxu0 0
      %1255 = vmatmul.mubr.bf16.gmra.mrb[0].mxu0 %v1220
      %v1256 = vpop.f32.mrb[0].mxu0
      %v1257 = vadd.f32 %v1217, %v1256
      %v1258 = vpop.f32.mrb[0].mxu0
      %v1259 = vadd.f32 %v1217, %v1258
      %v1260 = vpop.f32.mrb[0].mxu0
      %v1261 = vpop.f32.mrb[0].mxu0
      %1262 = vdwg.mxu0
      %v1263 = vadd.f32 %v1025, %v1257
      %v1264 = vadd.f32 %v1026, %v1259
      %v1267 = vcombine.low %v1263, %v1264
      %1269 = vst [vmem:[%s670] sm:$0x77] %v1267
      %p1270 = scmp.lt.s32.totalorder %s31, 1
      %s1271 = scalar_select %p1270, %s31, 1
      %s1272 = smul.addr %s1271, 2
      %s1273 = smul.addr %s1272, 4
      %s1274 = scalar_lea.vmem %s18, %s1273
      // Predicated region
      $region93: #{_lambda_.3} parent=91 // pred_check
        %p1275 = pneg %p462
      $region94: #{_lambda_.3} parent=91 // pred_check_branch
        %1277 = sbr.rel (%p1275) target = $region96
      $region95: #{_lambda_.3} parent=91 // pred_region
        _
      $region96: #{_lambda_.3} parent=91 // pred_fallthru
        _
    $region92: #{_lambda_.3} parent=5 // pred_fallthru
      _
    %p1278 = scmp.le.s32.totalorder 2, %s26
    // Predicated region
    $region97: #{_lambda_.3} parent=5 // pred_check
      %p1279 = pneg %p1278
    $region98: #{_lambda_.3} parent=5 // pred_check_branch
      %1281 = sbr.rel (%p1279) target = $region100
    $region99: #{_lambda_.3} parent=5 // pred_region
      %s1282 = ssub.s32 %s26, 2
      // Predicated region
      $region101: #{_lambda_.3} parent=99 // pred_check
        %p1283 = pneg %p468
      $region102: #{_lambda_.3} parent=99 // pred_check_branch
        %1285 = sbr.rel (%p1283) target = $region104
      $region103: #{_lambda_.3} parent=99 // pred_region
        %p1286 = scmp.lt.s32.totalorder %s32, 1
        %s1287 = scalar_select %p1286, %s32, 1
        %s1288 = smul.addr %s1287, 2
        %s1289 = smul.addr %s1288, 4
        %s1290 = scalar_lea.vmem %s18, %s1289
      $region104: #{_lambda_.3} parent=99 // pred_fallthru
        _
    $region100: #{_lambda_.3} parent=5 // pred_fallthru
      _
  $region6: #{_lambda_.3} parent=0 // loop_footer
    %s30 = sadd.s32 1, %s26
  $region7: #{_lambda_.3} parent=0 // loop_footer_branch
    %25 = sbr.rel target = $region3
  $region8: #{_lambda_.3} parent=0 // loop_exit
    _

// kernel: _lambda_.2
$region0: #{_lambda_.2}
  #allocation0 [shape = 'u32[]', space=smem, size = 0x4, offset = 0x4, fixed_abs, tag = 'smem constant byte address 0x4 - core index']
  #allocation1 [shape = 'u32[144,128]{1,0:T(1,128)}', space=vmem, size = 0x12000, scoped, tag = 'internal scratch']
  %s0 = inlined_call_operand.vmem [shape: f32[4,256], index: 0, kind: input, shape index: {}]
  %s1 = inlined_call_operand.vmem [shape: f32[2,1,256], index: 1, kind: input, shape index: {}]
  %s2 = inlined_call_operand.vmem [shape: f32[2,32,1], index: 2, kind: input, shape index: {}]
  %s3 = inlined_call_operand.vmem [shape: f32[32,4], index: 3, kind: input, shape index: {}]
  %s4 = inlined_call_operand.vmem [shape: f32[32,1], index: 4, kind: input, shape index: {}]
  %s5 = inlined_call_operand.vmem [shape: f32[16,32], index: 5, kind: input, shape index: {}]
  %s6 = inlined_call_operand.vmem [shape: f32[16,1], index: 6, kind: input, shape index: {}]
  %s7 = inlined_call_operand.vmem [shape: f32[5,16], index: 7, kind: input, shape index: {}]
  %s8 = inlined_call_operand.vmem [shape: f32[5,1], index: 8, kind: input, shape index: {}]
  %s9 = inlined_call_operand.vmem [shape: f32[2,16,256], index: 9, kind: output, shape index: {0}]
  %s10 = inlined_call_operand.vmem [shape: f32[2,5,256], index: 10, kind: output, shape index: {1}]
  %11 = xla_tuple %s9, %s10
  %s12 = sld [smem:[#allocation0]]
  $region77: #{_lambda_.2} parent=0
    _
  %s14 = ssub.s32 1, %s12
  %s15 = scalar_select 0, %s14, %s12
  loop: start=0, step=1, limit=4
  $region2: #{_lambda_.2} parent=0 // loop_pre_header
    _
  $region3: #{_lambda_.2} parent=0 // loop_header
    %s17 = sphi 0, %s21
    %p18 = scmp.ge.s32.totalorder %s17, 4
    %s25 = sphi 0, %s25
    %s27 = sphi 0, %s25
    %s28 = sphi 0, %s27
    %s42 = sphi 0, %s28
    %s48 = sphi 0, %s50
    %s51 = sphi 0, %s48
    %s52 = sphi 0, %s51
    %s68 = sphi 0, %s52
    %s74 = sphi 0, %s76
    %s77 = sphi 0, %s74
    %s78 = sphi 0, %s77
    %s94 = sphi 0, %s78
    %s98 = sphi 0, %s98
    %s100 = sphi 0, %s98
    %s101 = sphi 0, %s100
    %s115 = sphi 0, %s101
    %s119 = sphi 0, %s119
    %s121 = sphi 0, %s119
    %s122 = sphi 0, %s121
    %s136 = sphi 0, %s122
    %s140 = sphi 0, %s140
    %s142 = sphi 0, %s140
    %s143 = sphi 0, %s142
    %s157 = sphi 0, %s143
    %s161 = sphi 0, %s161
    %s163 = sphi 0, %s161
    %s164 = sphi 0, %s163
    %s178 = sphi 0, %s164
    %s182 = sphi 0, %s182
    %s184 = sphi 0, %s182
    %s185 = sphi 0, %s184
    %s199 = sphi 0, %s185
    %s203 = sphi 0, %s203
    %s205 = sphi 0, %s203
    %s206 = sphi 0, %s205
    %s220 = sphi 0, %s206
    %s226 = sphi 0, %s228
    %s229 = sphi 0, %s226
    %s230 = sphi 0, %s229
    %s246 = sphi 0, %s230
    %s252 = sphi 0, %s254
    %s255 = sphi 0, %s252
    %s256 = sphi 0, %s255
    %s272 = sphi 0, %s256
  $region4: #{_lambda_.2} parent=0 // loop_header_branch
    %20 = sbr.rel (%p18) target = $region8
  $region5: #{_lambda_.2} parent=0 // loop_body
    %s22 = ssub.s32 %s17, 1
    %s23 = ssub.s32 %s17, 2
    %s24 = sadd.s32 %s17, 1
    %s26 = sadd.s32 %s25, 1
    %p29 = scmp.eq.s32.totalorder %s17, 1
    %p30 = scmp.ne.s32.totalorder %s25, %s27
    %p31 = scmp.eq.s32.totalorder %s17, 0
    %p32 = por %p30, %p31
    %p33 = scmp.ne.s32.totalorder %s25, %s27
    %p34 = scmp.eq.s32.totalorder %s22, 1
    %p35 = por %p33, %p34
    %p36 = scmp.ne.s32.totalorder %s27, %s28
    %p37 = scmp.eq.s32.totalorder %s22, 0
    %p38 = por %p36, %p37
    %p39 = scmp.ne.s32.totalorder %s27, %s28
    %p40 = scmp.eq.s32.totalorder %s23, 1
    %p41 = por %p39, %p40
    %p43 = scmp.ne.s32.totalorder %s28, %s42
    %p44 = scmp.eq.s32.totalorder %s23, 0
    %p45 = por %p43, %p44
    %s46 = ssub.s32 %s17, %s24
    %p47 = scmp.eq.s32.totalorder %s46, 0
    %s49 = sadd.s32 %s48, 1
    %s50 = scalar_select %p47, %s48, %s49
    %p53 = pneg %p47
    %p54 = scmp.eq.s32.totalorder %s17, 1
    %p55 = por %p53, %p54
    %p56 = scmp.ne.s32.totalorder %s48, %s51
    %p57 = scmp.eq.s32.totalorder %s17, 0
    %p58 = por %p56, %p57
    %p59 = scmp.ne.s32.totalorder %s48, %s51
    %p60 = scmp.eq.s32.totalorder %s22, 1
    %p61 = por %p59, %p60
    %p62 = scmp.ne.s32.totalorder %s51, %s52
    %p63 = scmp.eq.s32.totalorder %s22, 0
    %p64 = por %p62, %p63
    %p65 = scmp.ne.s32.totalorder %s51, %s52
    %p66 = scmp.eq.s32.totalorder %s23, 1
    %p67 = por %p65, %p66
    %p69 = scmp.ne.s32.totalorder %s52, %s68
    %p70 = scmp.eq.s32.totalorder %s23, 0
    %p71 = por %p69, %p70
    %s72 = ssub.s32 %s17, %s24
    %p73 = scmp.eq.s32.totalorder %s72, 0
    %s75 = sadd.s32 %s74, 1
    %s76 = scalar_select %p73, %s74, %s75
    %p79 = pneg %p73
    %p80 = scmp.eq.s32.totalorder %s17, 1
    %p81 = por %p79, %p80
    %p82 = scmp.ne.s32.totalorder %s74, %s77
    %p83 = scmp.eq.s32.totalorder %s17, 0
    %p84 = por %p82, %p83
    %p85 = scmp.ne.s32.totalorder %s74, %s77
    %p86 = scmp.eq.s32.totalorder %s22, 1
    %p87 = por %p85, %p86
    %p88 = scmp.ne.s32.totalorder %s77, %s78
    %p89 = scmp.eq.s32.totalorder %s22, 0
    %p90 = por %p88, %p89
    %p91 = scmp.ne.s32.totalorder %s77, %s78
    %p92 = scmp.eq.s32.totalorder %s23, 1
    %p93 = por %p91, %p92
    %p95 = scmp.ne.s32.totalorder %s78, %s94
    %p96 = scmp.eq.s32.totalorder %s23, 0
    %p97 = por %p95, %p96
    %s99 = sadd.s32 %s98, 1
    %p102 = scmp.eq.s32.totalorder %s17, 1
    %p103 = scmp.ne.s32.totalorder %s98, %s100
    %p104 = scmp.eq.s32.totalorder %s17, 0
    %p105 = por %p103, %p104
    %p106 = scmp.ne.s32.totalorder %s98, %s100
    %p107 = scmp.eq.s32.totalorder %s22, 1
    %p108 = por %p106, %p107
    %p109 = scmp.ne.s32.totalorder %s100, %s101
    %p110 = scmp.eq.s32.totalorder %s22, 0
    %p111 = por %p109, %p110
    %p112 = scmp.ne.s32.totalorder %s100, %s101
    %p113 = scmp.eq.s32.totalorder %s23, 1
    %p114 = por %p112, %p113
    %p116 = scmp.ne.s32.totalorder %s101, %s115
    %p117 = scmp.eq.s32.totalorder %s23, 0
    %p118 = por %p116, %p117
    %s120 = sadd.s32 %s119, 1
    %p123 = scmp.eq.s32.totalorder %s17, 1
    %p124 = scmp.ne.s32.totalorder %s119, %s121
    %p125 = scmp.eq.s32.totalorder %s17, 0
    %p126 = por %p124, %p125
    %p127 = scmp.ne.s32.totalorder %s119, %s121
    %p128 = scmp.eq.s32.totalorder %s22, 1
    %p129 = por %p127, %p128
    %p130 = scmp.ne.s32.totalorder %s121, %s122
    %p131 = scmp.eq.s32.totalorder %s22, 0
    %p132 = por %p130, %p131
    %p133 = scmp.ne.s32.totalorder %s121, %s122
    %p134 = scmp.eq.s32.totalorder %s23, 1
    %p135 = por %p133, %p134
    %p137 = scmp.ne.s32.totalorder %s122, %s136
    %p138 = scmp.eq.s32.totalorder %s23, 0
    %p139 = por %p137, %p138
    %s141 = sadd.s32 %s140, 1
    %p144 = scmp.eq.s32.totalorder %s17, 1
    %p145 = scmp.ne.s32.totalorder %s140, %s142
    %p146 = scmp.eq.s32.totalorder %s17, 0
    %p147 = por %p145, %p146
    %p148 = scmp.ne.s32.totalorder %s140, %s142
    %p149 = scmp.eq.s32.totalorder %s22, 1
    %p150 = por %p148, %p149
    %p151 = scmp.ne.s32.totalorder %s142, %s143
    %p152 = scmp.eq.s32.totalorder %s22, 0
    %p153 = por %p151, %p152
    %p154 = scmp.ne.s32.totalorder %s142, %s143
    %p155 = scmp.eq.s32.totalorder %s23, 1
    %p156 = por %p154, %p155
    %p158 = scmp.ne.s32.totalorder %s143, %s157
    %p159 = scmp.eq.s32.totalorder %s23, 0
    %p160 = por %p158, %p159
    %s162 = sadd.s32 %s161, 1
    %p165 = scmp.eq.s32.totalorder %s17, 1
    %p166 = scmp.ne.s32.totalorder %s161, %s163
    %p167 = scmp.eq.s32.totalorder %s17, 0
    %p168 = por %p166, %p167
    %p169 = scmp.ne.s32.totalorder %s161, %s163
    %p170 = scmp.eq.s32.totalorder %s22, 1
    %p171 = por %p169, %p170
    %p172 = scmp.ne.s32.totalorder %s163, %s164
    %p173 = scmp.eq.s32.totalorder %s22, 0
    %p174 = por %p172, %p173
    %p175 = scmp.ne.s32.totalorder %s163, %s164
    %p176 = scmp.eq.s32.totalorder %s23, 1
    %p177 = por %p175, %p176
    %p179 = scmp.ne.s32.totalorder %s164, %s178
    %p180 = scmp.eq.s32.totalorder %s23, 0
    %p181 = por %p179, %p180
    %s183 = sadd.s32 %s182, 1
    %p186 = scmp.eq.s32.totalorder %s17, 1
    %p187 = scmp.ne.s32.totalorder %s182, %s184
    %p188 = scmp.eq.s32.totalorder %s17, 0
    %p189 = por %p187, %p188
    %p190 = scmp.ne.s32.totalorder %s182, %s184
    %p191 = scmp.eq.s32.totalorder %s22, 1
    %p192 = por %p190, %p191
    %p193 = scmp.ne.s32.totalorder %s184, %s185
    %p194 = scmp.eq.s32.totalorder %s22, 0
    %p195 = por %p193, %p194
    %p196 = scmp.ne.s32.totalorder %s184, %s185
    %p197 = scmp.eq.s32.totalorder %s23, 1
    %p198 = por %p196, %p197
    %p200 = scmp.ne.s32.totalorder %s185, %s199
    %p201 = scmp.eq.s32.totalorder %s23, 0
    %p202 = por %p200, %p201
    %s204 = sadd.s32 %s203, 1
    %p207 = scmp.eq.s32.totalorder %s17, 1
    %p208 = scmp.ne.s32.totalorder %s203, %s205
    %p209 = scmp.eq.s32.totalorder %s17, 0
    %p210 = por %p208, %p209
    %p211 = scmp.ne.s32.totalorder %s203, %s205
    %p212 = scmp.eq.s32.totalorder %s22, 1
    %p213 = por %p211, %p212
    %p214 = scmp.ne.s32.totalorder %s205, %s206
    %p215 = scmp.eq.s32.totalorder %s22, 0
    %p216 = por %p214, %p215
    %p217 = scmp.ne.s32.totalorder %s205, %s206
    %p218 = scmp.eq.s32.totalorder %s23, 1
    %p219 = por %p217, %p218
    %p221 = scmp.ne.s32.totalorder %s206, %s220
    %p222 = scmp.eq.s32.totalorder %s23, 0
    %p223 = por %p221, %p222
    %s224 = ssub.s32 %s17, %s24
    %p225 = scmp.eq.s32.totalorder %s224, 0
    %s227 = sadd.s32 %s226, 1
    %s228 = scalar_select %p225, %s226, %s227
    %p231 = pneg %p225
    %p232 = scmp.eq.s32.totalorder %s17, 1
    %p233 = por %p231, %p232
    %p234 = scmp.ne.s32.totalorder %s226, %s229
    %p235 = scmp.eq.s32.totalorder %s17, 0
    %p236 = por %p234, %p235
    %p237 = scmp.ne.s32.totalorder %s226, %s229
    %p238 = scmp.eq.s32.totalorder %s22, 1
    %p239 = por %p237, %p238
    %p240 = scmp.ne.s32.totalorder %s229, %s230
    %p241 = scmp.eq.s32.totalorder %s22, 0
    %p242 = por %p240, %p241
    %p243 = scmp.ne.s32.totalorder %s229, %s230
    %p244 = scmp.eq.s32.totalorder %s23, 1
    %p245 = por %p243, %p244
    %p247 = scmp.ne.s32.totalorder %s230, %s246
    %p248 = scmp.eq.s32.totalorder %s23, 0
    %p249 = por %p247, %p248
    %s250 = ssub.s32 %s17, %s24
    %p251 = scmp.eq.s32.totalorder %s250, 0
    %s253 = sadd.s32 %s252, 1
    %s254 = scalar_select %p251, %s252, %s253
    %p257 = pneg %p251
    %p258 = scmp.eq.s32.totalorder %s17, 1
    %p259 = por %p257, %p258
    %p260 = scmp.ne.s32.totalorder %s252, %s255
    %p261 = scmp.eq.s32.totalorder %s17, 0
    %p262 = por %p260, %p261
    %p263 = scmp.ne.s32.totalorder %s252, %s255
    %p264 = scmp.eq.s32.totalorder %s22, 1
    %p265 = por %p263, %p264
    %p266 = scmp.ne.s32.totalorder %s255, %s256
    %p267 = scmp.eq.s32.totalorder %s22, 0
    %p268 = por %p266, %p267
    %p269 = scmp.ne.s32.totalorder %s255, %s256
    %p270 = scmp.eq.s32.totalorder %s23, 1
    %p271 = por %p269, %p270
    %p273 = scmp.ne.s32.totalorder %s256, %s272
    %p274 = scmp.eq.s32.totalorder %s23, 0
    %p275 = por %p273, %p274
    %p276 = scmp.le.s32.totalorder 1, %s17
    %p277 = scmp.lt.s32.totalorder %s17, 3
    %p278 = pnand %p276, %p277
    %p279 = pneg %p278
    // Predicated region
    $region9: #{_lambda_.2} parent=5 // pred_check
      _
    $region10: #{_lambda_.2} parent=5 // pred_check_branch
      %281 = sbr.rel (%p278) target = $region12
    $region11: #{_lambda_.2} parent=5 // pred_region
      %s282 = ssub.s32 %s17, 1
      // Predicated region
      $region13: #{_lambda_.2} parent=11 // pred_check
        %p283 = pneg %p38
      $region14: #{_lambda_.2} parent=11 // pred_check_branch
        %285 = sbr.rel (%p283) target = $region16
      $region15: #{_lambda_.2} parent=11 // pred_region
        _
      $region16: #{_lambda_.2} parent=11 // pred_fallthru
        _
      // Predicated region
      $region17: #{_lambda_.2} parent=11 // pred_check
        %p286 = pneg %p111
      $region18: #{_lambda_.2} parent=11 // pred_check_branch
        %288 = sbr.rel (%p286) target = $region20
      $region19: #{_lambda_.2} parent=11 // pred_region
        _
      $region20: #{_lambda_.2} parent=11 // pred_fallthru
        _
      // Predicated region
      $region21: #{_lambda_.2} parent=11 // pred_check
        %p289 = pneg %p132
      $region22: #{_lambda_.2} parent=11 // pred_check_branch
        %291 = sbr.rel (%p289) target = $region24
      $region23: #{_lambda_.2} parent=11 // pred_region
        _
      $region24: #{_lambda_.2} parent=11 // pred_fallthru
        _
      // Predicated region
      $region25: #{_lambda_.2} parent=11 // pred_check
        %p292 = pneg %p153
      $region26: #{_lambda_.2} parent=11 // pred_check_branch
        %294 = sbr.rel (%p292) target = $region28
      $region27: #{_lambda_.2} parent=11 // pred_region
        _
      $region28: #{_lambda_.2} parent=11 // pred_fallthru
        _
      // Predicated region
      $region29: #{_lambda_.2} parent=11 // pred_check
        %p295 = pneg %p174
      $region30: #{_lambda_.2} parent=11 // pred_check_branch
        %297 = sbr.rel (%p295) target = $region32
      $region31: #{_lambda_.2} parent=11 // pred_region
        _
      $region32: #{_lambda_.2} parent=11 // pred_fallthru
        _
      // Predicated region
      $region33: #{_lambda_.2} parent=11 // pred_check
        %p298 = pneg %p195
      $region34: #{_lambda_.2} parent=11 // pred_check_branch
        %300 = sbr.rel (%p298) target = $region36
      $region35: #{_lambda_.2} parent=11 // pred_region
        _
      $region36: #{_lambda_.2} parent=11 // pred_fallthru
        _
      // Predicated region
      $region37: #{_lambda_.2} parent=11 // pred_check
        %p301 = pneg %p216
      $region38: #{_lambda_.2} parent=11 // pred_check_branch
        %303 = sbr.rel (%p301) target = $region40
      $region39: #{_lambda_.2} parent=11 // pred_region
        _
      $region40: #{_lambda_.2} parent=11 // pred_fallthru
        _
    $region12: #{_lambda_.2} parent=5 // pred_fallthru
      _
    %p304 = scmp.lt.s32.totalorder %s17, 2
    // Predicated region
    $region41: #{_lambda_.2} parent=5 // pred_check
      %p305 = pneg %p304
    $region42: #{_lambda_.2} parent=5 // pred_check_branch
      %307 = sbr.rel (%p305) target = $region44
    $region43: #{_lambda_.2} parent=5 // pred_region
      // Predicated region
      $region45: #{_lambda_.2} parent=43 // pred_check
        %p308 = pneg %p58
      $region46: #{_lambda_.2} parent=43 // pred_check_branch
        %310 = sbr.rel (%p308) target = $region48
      $region47: #{_lambda_.2} parent=43 // pred_region
        %p311 = scmp.lt.s32.totalorder %s17, 1
        %s312 = scalar_select %p311, %s17, 1
        %s313 = smul.addr %s312, 2
        %s314 = scalar_lea.vmem %s1, %s313
      $region48: #{_lambda_.2} parent=43 // pred_fallthru
        _
      // Predicated region
      $region49: #{_lambda_.2} parent=43 // pred_check
        %p315 = pneg %p84
      $region50: #{_lambda_.2} parent=43 // pred_check_branch
        %317 = sbr.rel (%p315) target = $region52
      $region51: #{_lambda_.2} parent=43 // pred_region
        %p318 = scmp.lt.s32.totalorder %s17, 1
        %s319 = scalar_select %p318, %s17, 1
        %s320 = smul.addr %s319, 4
        %s321 = smul.addr %s320, 8
        %s322 = scalar_lea.vmem %s2, %s321
      $region52: #{_lambda_.2} parent=43 // pred_fallthru
        _
    $region44: #{_lambda_.2} parent=5 // pred_fallthru
      _
    %p323 = scmp.le.s32.totalorder 1, %s17
    %p324 = scmp.lt.s32.totalorder %s17, 3
    %p325 = pnand %p323, %p324
    %p326 = pneg %p325
    // Predicated region
    $region53: #{_lambda_.2} parent=5 // pred_check
      _
    $region54: #{_lambda_.2} parent=5 // pred_check_branch
      %328 = sbr.rel (%p325) target = $region56
    $region55: #{_lambda_.2} parent=5 // pred_region
      %s329 = ssub.s32 %s17, 1
      %p330 = pneg %p38
      %p331 = pneg %p35
      %p332 = scmp.lt.s32.totalorder %s22, 1
      %s333 = scalar_select %p332, %s22, 1
      %s334 = smul.addr %s333, 2
      %s335 = scalar_lea.vmem %s1, %s334
      %p336 = pneg %p64
      %p337 = pneg %p61
      %p338 = scmp.lt.s32.totalorder %s22, 1
      %s339 = scalar_select %p338, %s22, 1
      %s340 = smul.addr %s339, 4
      %s341 = smul.addr %s340, 8
      %s342 = scalar_lea.vmem %s2, %s341
      %p343 = pneg %p90
      %p344 = pneg %p87
      %p345 = pneg %p111
      %p346 = pneg %p108
      %p347 = pneg %p132
      %p348 = pneg %p129
      %p349 = pneg %p153
      %p350 = pneg %p150
      %p351 = pneg %p174
      %p352 = pneg %p171
      %p353 = pneg %p195
      %p354 = pneg %p192
      %p355 = pneg %p216
      %p356 = pneg %p213
      %p357 = pneg %p242
      %p358 = pneg %p239
      %p359 = scmp.lt.s32.totalorder %s22, 1
      %s360 = scalar_select %p359, %s22, 1
      %s361 = smul.addr %s360, 4
      %s362 = smul.addr %s361, 8
      %s363 = scalar_lea.vmem %s9, %s362
      %p364 = pneg %p268
      %p365 = pneg %p265
      %p366 = scmp.lt.s32.totalorder %s22, 1
      %s367 = scalar_select %p366, %s22, 1
      %s368 = smul.addr %s367, 2
      %s369 = smul.addr %s368, 8
      %s370 = scalar_lea.vmem %s10, %s369
      %p371 = scmp.lt.s32.totalorder %s22, 1
      %s372 = scalar_select %p371, %s22, 1
      %s373 = smul.addr %s372, 2
      %s374 = scalar_lea.vmem %s1, %s373
      %p375 = scmp.lt.s32.totalorder %s22, 1
      %s376 = scalar_select %p375, %s22, 1
      %s377 = smul.addr %s376, 4
      %s378 = smul.addr %s377, 8
      %s379 = scalar_lea.vmem %s2, %s378
      %p380 = scmp.lt.s32.totalorder %s22, 1
      %s381 = scalar_select %p380, %s22, 1
      %s382 = smul.addr %s381, 4
      %s383 = smul.addr %s382, 8
      %s384 = scalar_lea.vmem %s9, %s383
      %p385 = scmp.lt.s32.totalorder %s22, 1
      %s386 = scalar_select %p385, %s22, 1
      %s387 = smul.addr %s386, 2
      %s388 = smul.addr %s387, 8
      %s389 = scalar_lea.vmem %s10, %s388
      %v391 = vld [vmem:[%s0] sm:$0xff]
      %v392 = vld [vmem:[%s374] sm:$0x3]
      %v393 = vld [vmem:[%s379] sm:$0xff]
      %v394 = vld [vmem:[%s379 + $0x8] sm:$0xff]
      %v395 = vld [vmem:[%s379 + $0x10] sm:$0xff]
      %v396 = vld [vmem:[%s379 + $0x18] sm:$0xff]
      %v397 = vld [vmem:[%s3] sm:$0xff]
      %v398 = vld [vmem:[%s3 + $0x8] sm:$0xff]
      %v399 = vld [vmem:[%s3 + $0x10] sm:$0xff]
      %v400 = vld [vmem:[%s3 + $0x18] sm:$0xff]
      %v401 = vpack.c.bf16 %v398, %v397
      %v402 = vpack.c.bf16 %v400, %v399
      %v404 = vcombine.high %v391, %v391
      %v406 = vpack.c.bf16 %v391, %v391
      %v407 = vpack.c.bf16 %v404, %v404
      %v408 = vld [vmem:[%s4] sm:$0xff]
      %v409 = vld [vmem:[%s4 + $0x8] sm:$0xff]
      %v410 = vld [vmem:[%s4 + $0x10] sm:$0xff]
      %v411 = vld [vmem:[%s4 + $0x18] sm:$0xff]
      %413 = vset.pattern.permute.xlu0 0
      %414 = vperm.xlu0 %413, %v408
      %v415 = vpop.permute.xlu0 %414
      %418 = vset.pattern.permute.xlu0 0
      %419 = vperm.xlu0 %418, %v409
      %v420 = vpop.permute.xlu0 %419
      %423 = vset.pattern.permute.xlu0 0
      %424 = vperm.xlu0 %423, %v410
      %v425 = vpop.permute.xlu0 %424
      %428 = vset.pattern.permute.xlu0 0
      %429 = vperm.xlu0 %428, %v411
      %v430 = vpop.permute.xlu0 %429
      %v433 = vlaneseq
      %v434 = vshrl.u32 %v433, 7
      %v435 = vsub.s32 0, %v434
      %v436 = vrot.slane %v392, %v435
      %v437 = vlaneseq
      %v438 = vshrl.u32 %v437, 7
      %v439 = vsub.s32 1, %v438
      %v440 = vrot.slane %v392, %v439
      %v443 = vmul.f32 %v415, %v436
      %v444 = vmul.f32 %v415, %v440
      %v445 = vmul.f32 %v420, %v436
      %v446 = vmul.f32 %v420, %v440
      %v447 = vmul.f32 %v425, %v436
      %v448 = vmul.f32 %v425, %v440
      %v449 = vmul.f32 %v430, %v436
      %v450 = vmul.f32 %v430, %v440
      %vm451 = vcmask 31744
      %v453 = vsel %vm451, %v401, 0
      %v456 = vsel %vm451, %v402, 0
      %vm458 = vcmask 1041408
      %v460 = vsel %vm458, %v406, 0
      %v463 = vsel %vm458, %v407, 0
      %465 = vmatprep.subr.bf16.mxu0 %v463
      %466 = vmatpush1.bf16.msra.mxu0 %v460
      %467 = vmatprep.subr.bf16.mxu0 0
      %468 = vmatpush1.bf16.msra.mxu0 0
      %469 = vmatprep.subr.bf16.mxu0 0
      %470 = vmatpush1.bf16.msra.mxu0 0
      %471 = vmatprep.subr.bf16.mxu0 0
      %472 = vmatpush1.bf16.msra.mxu0 0
      %473 = vmatprep.subr.bf16.mxu0 0
      %474 = vmatpush1.bf16.msra.mxu0 0
      %475 = vmatprep.subr.bf16.mxu0 0
      %476 = vmatpush1.bf16.msra.mxu0 0
      %477 = vmatprep.subr.bf16.mxu0 0
      %478 = vmatpush1.bf16.msra.mxu0 0
      %479 = vmatprep.subr.bf16.mxu0 0
      %480 = vmatpush1.bf16.msra.mxu0 0
      %481 = vmatprep.subr.bf16.mxu0 0
      %482 = vmatpush1.bf16.msra.mxu0 0
      %483 = vmatprep.subr.bf16.mxu0 0
      %484 = vmatpush1.bf16.msra.mxu0 0
      %485 = vmatprep.subr.bf16.mxu0 0
      %486 = vmatpush1.bf16.msra.mxu0 0
      %487 = vmatprep.subr.bf16.mxu0 0
      %488 = vmatpush1.bf16.msra.mxu0 0
      %489 = vmatprep.subr.bf16.mxu0 0
      %490 = vmatpush1.bf16.msra.mxu0 0
      %491 = vmatprep.subr.bf16.mxu0 0
      %492 = vmatpush1.bf16.msra.mxu0 0
      %493 = vmatprep.subr.bf16.mxu0 0
      %494 = vmatpush1.bf16.msra.mxu0 0
      %495 = vmatprep.subr.bf16.mxu0 0
      %496 = vmatpush1.bf16.msra.mxu0 0
      %497 = vmatprep.mubr.bf16.mxu0 0
      %498 = vmatmul.mubr.bf16.gmra.mrb[0].mxu0 %v453
      %v499 = vpop.f32.mrb[0].mxu0
      %v500 = vadd.f32 %v443, %v499
      %v501 = vpop.f32.mrb[0].mxu0
      %v502 = vadd.f32 %v444, %v501
      %v503 = vpop.f32.mrb[0].mxu0
      %v504 = vadd.f32 %v445, %v503
      %v505 = vpop.f32.mrb[0].mxu0
      %v506 = vadd.f32 %v446, %v505
      %507 = vmatprep.mubr.bf16.mxu0 0
      %508 = vmatmul.mubr.bf16.gmra.mrb[0].mxu0 %v456
      %v509 = vpop.f32.mrb[0].mxu0
      %v510 = vadd.f32 %v447, %v509
      %v511 = vpop.f32.mrb[0].mxu0
      %v512 = vadd.f32 %v448, %v511
      %v513 = vpop.f32.mrb[0].mxu0
      %v514 = vadd.f32 %v449, %v513
      %v515 = vpop.f32.mrb[0].mxu0
      %v516 = vadd.f32 %v450, %v515
      %517 = vdwg.mxu0
      %519 = vset.pattern.permute.xlu0 0
      %520 = vperm.xlu0 %519, %v393
      %v521 = vpop.permute.xlu0 %520
      %524 = vset.pattern.permute.xlu0 0
      %525 = vperm.xlu0 %524, %v394
      %v526 = vpop.permute.xlu0 %525
      %529 = vset.pattern.permute.xlu0 0
      %530 = vperm.xlu0 %529, %v395
      %v531 = vpop.permute.xlu0 %530
      %534 = vset.pattern.permute.xlu0 0
      %535 = vperm.xlu0 %534, %v396
      %v536 = vpop.permute.xlu0 %535
      %v538 = vadd.f32 %v500, %v521
      %v539 = vadd.f32 %v502, %v521
      %v540 = vadd.f32 %v504, %v526
      %v541 = vadd.f32 %v506, %v526
      %v542 = vadd.f32 %v510, %v531
      %v543 = vadd.f32 %v512, %v531
      %v544 = vadd.f32 %v514, %v536
      %v545 = vadd.f32 %v516, %v536
      %vm546 = vcmp.ge.f32.partialorder %v538, 0.0
      %vm547 = vcmp.ge.f32.partialorder %v539, 0.0
      %vm548 = vcmp.ge.f32.partialorder %v540, 0.0
      %vm549 = vcmp.ge.f32.partialorder %v541, 0.0
      %vm550 = vcmp.ge.f32.partialorder %v542, 0.0
      %vm551 = vcmp.ge.f32.partialorder %v543, 0.0
      %vm552 = vcmp.ge.f32.partialorder %v544, 0.0
      %vm553 = vcmp.ge.f32.partialorder %v545, 0.0
      %v554 = vmul.f32 %v538, 0.2
      %v555 = vmul.f32 %v539, 0.2
      %v556 = vmul.f32 %v540, 0.2
      %v557 = vmul.f32 %v541, 0.2
      %v558 = vmul.f32 %v542, 0.2
      %v559 = vmul.f32 %v543, 0.2
      %v560 = vmul.f32 %v544, 0.2
      %v561 = vmul.f32 %v545, 0.2
      %v562 = vsel %vm546, %v538, %v554
      %v563 = vsel %vm547, %v539, %v555
      %v564 = vsel %vm548, %v540, %v556
      %v565 = vsel %vm549, %v541, %v557
      %v566 = vsel %vm550, %v542, %v558
      %v567 = vsel %vm551, %v543, %v559
      %v568 = vsel %vm552, %v544, %v560
      %v569 = vsel %vm553, %v545, %v561
      %v570 = vmul.f32 %v562, 1.4142135
      %v571 = vmul.f32 %v563, 1.4142135
      %v572 = vmul.f32 %v564, 1.4142135
      %v573 = vmul.f32 %v565, 1.4142135
      %v574 = vmul.f32 %v566, 1.4142135
      %v575 = vmul.f32 %v567, 1.4142135
      %v576 = vmul.f32 %v568, 1.4142135
      %v577 = vmul.f32 %v569, 1.4142135
      %v578 = vld [vmem:[%s5] sm:$0xff]
      %v579 = vld [vmem:[%s5 + $0x8] sm:$0xff]
      %v580 = vpack.c.bf16 %v579, %v578
      %v581 = vpack.c.bf16 %v572, %v570
      %v582 = vpack.c.bf16 %v573, %v571
      %v583 = vpack.c.bf16 %v576, %v574
      %v584 = vpack.c.bf16 %v577, %v575
      %v585 = vld [vmem:[%s6] sm:$0xff]
      %v586 = vld [vmem:[%s6 + $0x8] sm:$0xff]
      %588 = vset.pattern.permute.xlu0 0
      %589 = vperm.xlu0 %588, %v585
      %v590 = vpop.permute.xlu0 %589
      %593 = vset.pattern.permute.xlu0 0
      %594 = vperm.xlu0 %593, %v586
      %v595 = vpop.permute.xlu0 %594
      %vm597 = vcmask 261120
      %v599 = vsel %vm597, %v580, 0
      %601 = vmatprep.subr.bf16.mxu0 %v582
      %602 = vmatpush1.bf16.msra.mxu0 %v581
      %603 = vmatprep.subr.bf16.mxu0 %v584
      %604 = vmatpush1.bf16.msra.mxu0 %v583
      %605 = vmatprep.subr.bf16.mxu0 0
      %606 = vmatpush1.bf16.msra.mxu0 0
      %607 = vmatprep.subr.bf16.mxu0 0
      %608 = vmatpush1.bf16.msra.mxu0 0
      %609 = vmatprep.subr.bf16.mxu0 0
      %610 = vmatpush1.bf16.msra.mxu0 0
      %611 = vmatprep.subr.bf16.mxu0 0
      %612 = vmatpush1.bf16.msra.mxu0 0
      %613 = vmatprep.subr.bf16.mxu0 0
      %614 = vmatpush1.bf16.msra.mxu0 0
      %615 = vmatprep.subr.bf16.mxu0 0
      %616 = vmatpush1.bf16.msra.mxu0 0
      %617 = vmatprep.subr.bf16.mxu0 0
      %618 = vmatpush1.bf16.msra.mxu0 0
      %619 = vmatprep.subr.bf16.mxu0 0
      %620 = vmatpush1.bf16.msra.mxu0 0
      %621 = vmatprep.subr.bf16.mxu0 0
      %622 = vmatpush1.bf16.msra.mxu0 0
      %623 = vmatprep.subr.bf16.mxu0 0
      %624 = vmatpush1.bf16.msra.mxu0 0
      %625 = vmatprep.subr.bf16.mxu0 0
      %626 = vmatpush1.bf16.msra.mxu0 0
      %627 = vmatprep.subr.bf16.mxu0 0
      %628 = vmatpush1.bf16.msra.mxu0 0
      %629 = vmatprep.subr.bf16.mxu0 0
      %630 = vmatpush1.bf16.msra.mxu0 0
      %631 = vmatprep.subr.bf16.mxu0 0
      %632 = vmatpush1.bf16.msra.mxu0 0
      %633 = vmatprep.mubr.bf16.mxu0 0
      %634 = vmatmul.mubr.bf16.gmra.mrb[0].mxu0 %v599
      %v635 = vpop.f32.mrb[0].mxu0
      %v636 = vadd.f32 %v590, %v635
      %v637 = vpop.f32.mrb[0].mxu0
      %v638 = vadd.f32 %v590, %v637
      %v639 = vpop.f32.mrb[0].mxu0
      %v640 = vadd.f32 %v595, %v639
      %v641 = vpop.f32.mrb[0].mxu0
      %v642 = vadd.f32 %v595, %v641
      %643 = vdwg.mxu0
      %v644 = vld [vmem:[%s7] sm:$0x1f]
      %v645 = vpack.c.bf16 %v644, %v644
      %v646 = vpack.c.bf16 %v640, %v636
      %v647 = vpack.c.bf16 %v642, %v638
      %v648 = vld [vmem:[%s8] sm:$0x1f]
      %650 = vset.pattern.permute.xlu0 0
      %651 = vperm.xlu0 %650, %v648
      %v652 = vpop.permute.xlu0 %651
      %vm654 = vcmask 130048
      %v656 = vsel %vm654, %v645, 0
      %658 = vmatprep.subr.bf16.mxu0 %v647
      %659 = vmatpush1.bf16.msra.mxu0 %v646
      %660 = vmatprep.subr.bf16.mxu0 0
      %661 = vmatpush1.bf16.msra.mxu0 0
      %662 = vmatprep.subr.bf16.mxu0 0
      %663 = vmatpush1.bf16.msra.mxu0 0
      %664 = vmatprep.subr.bf16.mxu0 0
      %665 = vmatpush1.bf16.msra.mxu0 0
      %666 = vmatprep.subr.bf16.mxu0 0
      %667 = vmatpush1.bf16.msra.mxu0 0
      %668 = vmatprep.subr.bf16.mxu0 0
      %669 = vmatpush1.bf16.msra.mxu0 0
      %670 = vmatprep.subr.bf16.mxu0 0
      %671 = vmatpush1.bf16.msra.mxu0 0
      %672 = vmatprep.subr.bf16.mxu0 0
      %673 = vmatpush1.bf16.msra.mxu0 0
      %674 = vmatprep.subr.bf16.mxu0 0
      %675 = vmatpush1.bf16.msra.mxu0 0
      %676 = vmatprep.subr.bf16.mxu0 0
      %677 = vmatpush1.bf16.msra.mxu0 0
      %678 = vmatprep.subr.bf16.mxu0 0
      %679 = vmatpush1.bf16.msra.mxu0 0
      %680 = vmatprep.subr.bf16.mxu0 0
      %681 = vmatpush1.bf16.msra.mxu0 0
      %682 = vmatprep.subr.bf16.mxu0 0
      %683 = vmatpush1.bf16.msra.mxu0 0
      %684 = vmatprep.subr.bf16.mxu0 0
      %685 = vmatpush1.bf16.msra.mxu0 0
      %686 = vmatprep.subr.bf16.mxu0 0
      %687 = vmatpush1.bf16.msra.mxu0 0
      %688 = vmatprep.subr.bf16.mxu0 0
      %689 = vmatpush1.bf16.msra.mxu0 0
      %690 = vmatprep.mubr.bf16.mxu0 0
      %691 = vmatmul.mubr.bf16.gmra.mrb[0].mxu0 %v656
      %v692 = vpop.f32.mrb[0].mxu0
      %v693 = vadd.f32 %v652, %v692
      %v694 = vpop.f32.mrb[0].mxu0
      %v695 = vadd.f32 %v652, %v694
      %v696 = vpop.f32.mrb[0].mxu0
      %v697 = vpop.f32.mrb[0].mxu0
      %698 = vdwg.mxu0
      %v699 = vlaneseq
      %v700 = vshrl.u32 %v699, 7
      %vm701 = vcmp.eq.s32.totalorder %v700, 4
      %v702 = vxor.u32 %v693, 2147483648
      %v703 = vxor.u32 %v695, 2147483648
      %v704 = vmul.f32 %v702, 1.442695
      %v705 = vpow.pop %v704
      %v706 = vmul.f32 %v703, 1.442695
      %v707 = vpow.pop %v706
      %v708 = vadd.f32 %v705, 1.0
      %v709 = vadd.f32 %v707, 1.0
      %v710 = vrcp.pop %v708
      %v711 = vmul.f32 1.0, %v710
      %v712 = vrcp.pop %v709
      %v713 = vmul.f32 1.0, %v712
      %v714 = vsel %vm701, %v711, %v693
      %v715 = vsel %vm701, %v713, %v695
      %716 = vst [vmem:[%s384] sm:$0xff] %v636
      %717 = vst [vmem:[%s384 + $0x8] sm:$0xff] %v638
      %718 = vst [vmem:[%s384 + $0x10] sm:$0xff] %v640
      %719 = vst [vmem:[%s384 + $0x18] sm:$0xff] %v642
      %720 = vst [vmem:[%s389] sm:$0x1f] %v714
      %721 = vst [vmem:[%s389 + $0x8] sm:$0x1f] %v715
      %p722 = scmp.lt.s32.totalorder %s22, 1
      %s723 = scalar_select %p722, %s22, 1
      %s724 = smul.addr %s723, 4
      %s725 = smul.addr %s724, 8
      %s726 = scalar_lea.vmem %s9, %s725
      %p727 = scmp.lt.s32.totalorder %s22, 1
      %s728 = scalar_select %p727, %s22, 1
      %s729 = smul.addr %s728, 2
      %s730 = smul.addr %s729, 8
      %s731 = scalar_lea.vmem %s10, %s730
      // Predicated region
      $region57: #{_lambda_.2} parent=55 // pred_check
        %p732 = pneg %p239
      $region58: #{_lambda_.2} parent=55 // pred_check_branch
        %734 = sbr.rel (%p732) target = $region60
      $region59: #{_lambda_.2} parent=55 // pred_region
        _
      $region60: #{_lambda_.2} parent=55 // pred_fallthru
        _
      // Predicated region
      $region61: #{_lambda_.2} parent=55 // pred_check
        %p735 = pneg %p265
      $region62: #{_lambda_.2} parent=55 // pred_check_branch
        %737 = sbr.rel (%p735) target = $region64
      $region63: #{_lambda_.2} parent=55 // pred_region
        _
      $region64: #{_lambda_.2} parent=55 // pred_fallthru
        _
    $region56: #{_lambda_.2} parent=5 // pred_fallthru
      _
    %p738 = scmp.le.s32.totalorder 2, %s17
    // Predicated region
    $region65: #{_lambda_.2} parent=5 // pred_check
      %p739 = pneg %p738
    $region66: #{_lambda_.2} parent=5 // pred_check_branch
      %741 = sbr.rel (%p739) target = $region68
    $region67: #{_lambda_.2} parent=5 // pred_region
      %s742 = ssub.s32 %s17, 2
      // Predicated region
      $region69: #{_lambda_.2} parent=67 // pred_check
        %p743 = pneg %p245
      $region70: #{_lambda_.2} parent=67 // pred_check_branch
        %745 = sbr.rel (%p743) target = $region72
      $region71: #{_lambda_.2} parent=67 // pred_region
        %p746 = scmp.lt.s32.totalorder %s23, 1
        %s747 = scalar_select %p746, %s23, 1
        %s748 = smul.addr %s747, 4
        %s749 = smul.addr %s748, 8
        %s750 = scalar_lea.vmem %s9, %s749
      $region72: #{_lambda_.2} parent=67 // pred_fallthru
        _
      // Predicated region
      $region73: #{_lambda_.2} parent=67 // pred_check
        %p751 = pneg %p271
      $region74: #{_lambda_.2} parent=67 // pred_check_branch
        %753 = sbr.rel (%p751) target = $region76
      $region75: #{_lambda_.2} parent=67 // pred_region
        %p754 = scmp.lt.s32.totalorder %s23, 1
        %s755 = scalar_select %p754, %s23, 1
        %s756 = smul.addr %s755, 2
        %s757 = smul.addr %s756, 8
        %s758 = scalar_lea.vmem %s10, %s757
      $region76: #{_lambda_.2} parent=67 // pred_fallthru
        _
    $region68: #{_lambda_.2} parent=5 // pred_fallthru
      _
  $region6: #{_lambda_.2} parent=0 // loop_footer
    %s21 = sadd.s32 1, %s17
  $region7: #{_lambda_.2} parent=0 // loop_footer_branch
    %16 = sbr.rel target = $region3
  $region8: #{_lambda_.2} parent=0 // loop_exit
    _

</llo_original>
